<compile_context>
chip_gen: v7x
topology: tpu7x:2x2x1
jax: 0.10.0
libtpu: 0.0.40
codegen_flags: <defaults>
</compile_context>

<pallas_src>
import functools
import math

import jax
import jax.numpy as jnp
import numpy as np
from jax import lax
from jax.experimental import pallas as pl
from jax.experimental.pallas import tpu as pltpu


_SQRT_2_OVER_PI = math.sqrt(2.0 / math.pi)


def _gelu(x):
    # tanh-approximate GELU (PyTorch nn.GELU() uses exact erf; difference ~1e-3).
    return 0.5 * x * (1.0 + jnp.tanh(_SQRT_2_OVER_PI * (x + 0.044715 * x * x * x)))


# ---------------------------------------------------------------------------
# Fused Pallas kernel: distances + 3-NN weights + single-matmul gather +
# fuse conv (+folded BN+GELU) + residual extraction blocks, bf16 MXU MLP.
# ---------------------------------------------------------------------------
def _fp_kernel(n_blocks, k, has_points1, *refs):
    # ref order: xyz1, xyz2t, pts2, [pts1, wf_p1], wf_in, biases, [blk_w], out
    i = 0
    xyz1_ref = refs[i]; i += 1
    xyz2t_ref = refs[i]; i += 1
    pts2_ref = refs[i]; i += 1
    if has_points1:
        pts1_ref = refs[i]; i += 1
        wf_p1_ref = refs[i]; i += 1
    wf_in_ref = refs[i]; i += 1
    bias_ref = refs[i]; i += 1
    if n_blocks > 0:
        blk_w_ref = refs[i]; i += 1
    out_ref = refs[-1]

    xyz1 = xyz1_ref[...].astype(jnp.float32)      # (TN, C)
    xyz2t = xyz2t_ref[...].astype(jnp.float32)    # (C, S)
    TN, C = xyz1.shape
    S = xyz2t.shape[1]

    # ---- squared distances on the VPU: sum_c (x1_c - x2_c)^2 ------------------
    dist = jnp.zeros((TN, S), jnp.float32)
    for c in range(C):
        diff = xyz1[:, c:c + 1] - xyz2t[c:c + 1, :]     # (TN,1)-(1,S) -> (TN,S)
        dist = dist + diff * diff

    # ---- k nearest neighbours -> sparse inverse-distance weight matrix --------
    # (ties broken to the smallest index; the weighted sum is order-invariant so
    #  this matches torch's sort-based selection).
    lane_ids = lax.broadcasted_iota(jnp.int32, (TN, S), 1)
    work = dist
    w_mat = jnp.zeros((TN, S), jnp.float32)
    norm = jnp.zeros((TN, 1), jnp.float32)
    for _ in range(k):  # k <= 3: tiny static unroll
        min_val = jnp.min(work, axis=-1, keepdims=True)                 # (TN,1)
        sel = jnp.min(jnp.where(work <= min_val, lane_ids, S),
                      axis=-1, keepdims=True)                           # (TN,1)
        onehot = lane_ids == sel                                        # (TN,S)
        recip = 1.0 / (min_val + 1e-8)
        w_mat = w_mat + jnp.where(onehot, recip, 0.0)
        norm = norm + recip
        work = jnp.where(onehot, jnp.float32(jnp.inf), work)

    # ---- ONE f32 MXU matmul does gather + weighted sum for all k neighbours ---
    pts2 = pts2_ref[...].astype(jnp.float32)                            # (S, D2)
    interp = lax.dot_general(w_mat, pts2, (((1,), (0,)), ((), ())),
                             preferred_element_type=jnp.float32)        # (TN, D2)
    # normalize on the (TN, D2) result (EUP reciprocal) instead of a (TN, S) pass
    interp = interp * pl.reciprocal(norm, approx=True)

    bias = bias_ref[...].astype(jnp.float32)                            # (L, Cout)

    # ---- fuse 1x1 conv: concat folded into two bf16 MXU matmuls ---------------
    h = jnp.dot(interp.astype(jnp.bfloat16), wf_in_ref[...],
                preferred_element_type=jnp.float32)                     # (TN, Cout)
    if has_points1:
        pts1_t = jnp.transpose(pts1_ref[...])                           # (TN, D1)
        h = h + jnp.dot(pts1_t.astype(jnp.bfloat16), wf_p1_ref[...],
                        preferred_element_type=jnp.float32)
    h = _gelu(h + bias[0:1, :])

    # ---- FCBNReLU1DRes extraction blocks (BN scale folded into weights) -------
    for j in range(n_blocks):
        w1 = blk_w_ref[2 * j]                                           # (Cout,Cout) bf16
        w2 = blk_w_ref[2 * j + 1]
        y = jnp.dot(h.astype(jnp.bfloat16), w1, preferred_element_type=jnp.float32)
        y = _gelu(y + bias[2 * j + 1:2 * j + 2, :])
        y = jnp.dot(y.astype(jnp.bfloat16), w2, preferred_element_type=jnp.float32)
        y = y + bias[2 * j + 2:2 * j + 3, :]
        h = _gelu(y + h)

    # ---- lane-dense (Cout, TN) store: output already in (B, Cout, N) layout ---
    out_ref[...] = jnp.transpose(h).astype(out_ref.dtype)


# ---------------------------------------------------------------------------
# Wrapper: layout plumbing, BN folding, BlockSpecs / grid
# ---------------------------------------------------------------------------
def _pick_tile(n, s, b):
    """Tile size along N.

    Layout rule: TN must be a multiple of 128 OR equal to N (points1 is fed
    natively as (D1, TN) and the output stored lane-dense as (Cout, TN)).
    """
    if n <= 128:
        return n
    if n % 128 != 0 and n <= 256:
        return n
    # Prefer 256-wide tiles for the 256x256 MXUs (v6e/v7x); shrink to 128 when
    # S is large (bounds the (TN, S) k-NN working set) or when the grid would
    # not expose >= 2 parallel tiles (feed v7x's two TensorCores).
    tn = 256
    if s >= 1024 or b * max(n // 256, 1) < 2:
        tn = 128
    return tn


def _fold_bn(bn, eps=1e-5):
    scale = bn["gamma"] / jnp.sqrt(bn["var"] + eps)
    shift = bn["beta"] - bn["mean"] * scale
    return scale.reshape(1, -1), shift.reshape(1, -1)


def feature_propagation_forward(params, xyz1, xyz2, points1, points2):
    """Mirror of FeaturePropagation.forward.

    xyz1: (B,N,3)  xyz2: (B,S,3)  points1: (B,D1,N) or None  points2: (B,D2,S)
    returns: (B, out_channel, N)
    """
    B, N, C = xyz1.shape
    _, S, _ = xyz2.shape
    pts2 = jnp.transpose(points2, (0, 2, 1))          # (B, S, D2)
    D2 = pts2.shape[-1]
    xyz2t = jnp.transpose(xyz2, (0, 2, 1))            # (B, C, S)

    has_points1 = points1 is not None
    D1 = points1.shape[1] if has_points1 else 0       # points1 stays native (B,D1,N)

    n_blocks = len(params["blocks"])
    out_ch = params["fuse_w"].shape[0]
    k = min(3, S)                                     # S==1 degenerates to "repeat"

    # ---- fold BN scale into conv weights, pre-cast MLP weights to bf16 --------
    sf, bf_ = _fold_bn(params["fuse_bn"])
    wf_t = jnp.transpose(params["fuse_w"]).astype(jnp.float32) * sf     # (Cin, Cout)
    biases = [bf_]
    if has_points1:
        wf_p1 = wf_t[:D1].astype(jnp.bfloat16)        # (D1, Cout)
        wf_in = wf_t[D1:].astype(jnp.bfloat16)        # (D2, Cout)
    else:
        wf_p1 = None
        wf_in = wf_t.astype(jnp.bfloat16)
    blk_ws = []
    for blk in params["blocks"]:
        s1, b1 = _fold_bn(blk["bn1"])
        s2, b2 = _fold_bn(blk["bn2"])
        blk_ws.append((jnp.transpose(blk["w1"]) * s1).astype(jnp.bfloat16))
        blk_ws.append((jnp.transpose(blk["w2"]) * s2).astype(jnp.bfloat16))
        biases += [b1, b2]
    bias_arr = jnp.concatenate(biases, axis=0)                    # (1+2n, Cout) f32
    blk_w_arr = jnp.stack(blk_ws, axis=0) if blk_ws else None     # (2n, Cout, Cout)

    TN = _pick_tile(N, S, B)
    grid = (B, pl.cdiv(N, TN))

    in_arrays = [xyz1, xyz2t, pts2]
    in_specs = [
        pl.BlockSpec((None, TN, C), lambda b, n: (b, n, 0)),   # xyz1 tile
        pl.BlockSpec((None, C, S), lambda b, n: (b, 0, 0)),    # xyz2^T (per batch)
        pl.BlockSpec((None, S, D2), lambda b, n: (b, 0, 0)),   # points2 (per batch)
    ]
    if has_points1:
        in_arrays.append(points1)                              # native (B, D1, N)
        in_specs.append(pl.BlockSpec((None, D1, TN), lambda b, n: (b, 0, n)))
        in_arrays.append(wf_p1)
        in_specs.append(pl.BlockSpec(wf_p1.shape, lambda b, n: (0, 0)))
    in_arrays.append(wf_in)
    in_specs.append(pl.BlockSpec(wf_in.shape, lambda b, n: (0, 0)))
    in_arrays.append(bias_arr)
    in_specs.append(pl.BlockSpec(bias_arr.shape, lambda b, n: (0, 0)))
    if n_blocks > 0:
        in_arrays.append(blk_w_arr)
        in_specs.append(pl.BlockSpec(blk_w_arr.shape, lambda b, n: (0, 0, 0)))

    out_specs = pl.BlockSpec((None, out_ch, TN), lambda b, n: (b, 0, n))

    # ---- VMEM budget: double-buffered tiles + kernel intermediates, cap 48 MiB
    io_bytes = 2 * (TN * C + C * S + S * D2 + out_ch * TN) * 4
    io_bytes += 2 * (1 + 2 * n_blocks) * out_ch * 4
    io_bytes += 2 * D2 * out_ch * 2
    if has_points1:
        io_bytes += 2 * D1 * TN * 4 + 2 * D1 * out_ch * 2
    if n_blocks > 0:
        io_bytes += 2 * 2 * n_blocks * out_ch * out_ch * 2
    scratch_bytes = 6 * TN * S * 4 + 6 * TN * max(D2, out_ch, C) * 4
    vmem_limit = int(min(48 << 20, max(32 << 20, 2 * (io_bytes + scratch_bytes))))

    kernel = functools.partial(_fp_kernel, n_blocks, k, has_points1)
    out = pl.pallas_call(
        kernel,
        out_shape=jax.ShapeDtypeStruct((B, out_ch, N), points2.dtype),
        grid=grid,
        in_specs=in_specs,
        out_specs=out_specs,
        compiler_params=pltpu.CompilerParams(
            dimension_semantics=("parallel", "parallel"),
            vmem_limit_bytes=vmem_limit,
        ),
    )(*in_arrays)

    return out                                         # already (B, Cout, N)


# ---------------------------------------------------------------------------
# Parameter init (conv/BN params; the grouping itself has no learnable state)
# ---------------------------------------------------------------------------
def _init_bn(key, c):
    k1, k2, k3, k4 = jax.random.split(key, 4)
    return {"gamma": jax.random.uniform(k1, (c,), jnp.float32, minval=0.5, maxval=1.5),
            "beta": 0.1 * jax.random.normal(k2, (c,), jnp.float32),
            "mean": 0.1 * jax.random.normal(k3, (c,), jnp.float32),
            "var": jax.random.uniform(k4, (c,), jnp.float32, minval=0.5, maxval=1.5)}


def init_params(key, in_channel, out_channel, blocks):
    keys = jax.random.split(key, 2 + 4 * blocks)
    params = {
        "fuse_w": 0.2 * jax.random.normal(keys[0], (out_channel, in_channel), jnp.float32),
        "fuse_bn": _init_bn(keys[1], out_channel),
        "blocks": [],
    }
    ki = 2
    for _ in range(blocks):
        params["blocks"].append({
            "w1": 0.2 * jax.random.normal(keys[ki], (out_channel, out_channel), jnp.float32),
            "bn1": _init_bn(keys[ki + 1], out_channel),
            "w2": 0.2 * jax.random.normal(keys[ki + 2], (out_channel, out_channel), jnp.float32),
            "bn2": _init_bn(keys[ki + 3], out_channel),
        })
        ki += 4
    return params


# ---------------------------------------------------------------------------
# Pure-JAX reference (same folded-BN / tanh-GELU / bf16-matmul numerics)
# ---------------------------------------------------------------------------
def _reference_forward(params, xyz1, xyz2, points1, points2):
    pts2 = jnp.transpose(points2, (0, 2, 1))            # (B,S,D2)
    S = xyz2.shape[1]
    k = min(3, S)

    diff = xyz1[:, :, None, :] - xyz2[:, None, :, :]    # (B,N,S,3)
    dist = jnp.sum(diff * diff, axis=-1)                # (B,N,S)
    idx = jnp.argsort(dist, axis=-1)[:, :, :k]          # stable: ties -> smallest index
    d_k = jnp.take_along_axis(dist, idx, axis=-1)
    recip = 1.0 / (d_k + 1e-8)
    w = recip / jnp.sum(recip, axis=-1, keepdims=True)
    gathered = jax.vmap(lambda p, i: p[i])(pts2, idx)    # (B,N,k,D2)
    interp = jnp.sum(gathered * w[..., None], axis=2)    # (B,N,D2)

    if points1 is not None:
        x = jnp.concatenate([jnp.transpose(points1, (0, 2, 1)), interp], axis=-1)
    else:
        x = interp

    sf, bf_ = _fold_bn(params["fuse_bn"])
    wf = (params["fuse_w"].T * sf).astype(jnp.bfloat16)
    h = _gelu(jnp.matmul(x.astype(jnp.bfloat16), wf,
                         preferred_element_type=jnp.float32) + bf_)
    for blk in params["blocks"]:
        s1, b1 = _fold_bn(blk["bn1"])
        s2, b2 = _fold_bn(blk["bn2"])
        w1 = (blk["w1"].T * s1).astype(jnp.bfloat16)
        w2 = (blk["w2"].T * s2).astype(jnp.bfloat16)
        y = _gelu(jnp.matmul(h.astype(jnp.bfloat16), w1,
                             preferred_element_type=jnp.float32) + b1)
        y = jnp.matmul(y.astype(jnp.bfloat16), w2,
                       preferred_element_type=jnp.float32) + b2
        h = _gelu(y + h)
    return jnp.transpose(h, (0, 2, 1))                   # (B,Cout,N)


# ---------------------------------------------------------------------------
if __name__ == "__main__":
    B, N, S = 2, 64, 16
    D1, D2 = 16, 16
    in_channel = D1 + D2
    out_channel = 32
    n_blocks = 1

    key = jax.random.PRNGKey(0)
    k_x1, k_x2, k_p1, k_p2, k_par = jax.random.split(key, 5)
    xyz1 = jax.random.normal(k_x1, (B, N, 3), jnp.float32)
    xyz2 = jax.random.normal(k_x2, (B, S, 3), jnp.float32)
    points1 = jax.random.normal(k_p1, (B, D1, N), jnp.float32)
    points2 = jax.random.normal(k_p2, (B, D2, S), jnp.float32)

    params = init_params(k_par, in_channel, out_channel, n_blocks)

    fwd = jax.jit(feature_propagation_forward)
    out = fwd(params, xyz1, xyz2, points1, points2)
    jax.block_until_ready(out)

    assert out.shape == (B, out_channel, N)
    assert bool(jnp.all(jnp.isfinite(out)))

    ref = _reference_forward(params, xyz1, xyz2, points1, points2)
    np.testing.assert_allclose(np.asarray(out), np.asarray(ref), rtol=2e-2, atol=2e-2)

    print("KERNEL_OK")
</pallas_src>

<mosaic_0001>
module attributes {stable_mosaic.version = 11 : i64} {
  func.func @_fp_kernel(%arg0: i32, %arg1: i32, %arg2: memref<1x64x3xf32, #tpu.memory_space<vmem>>, %arg3: memref<1x3x16xf32, #tpu.memory_space<vmem>>, %arg4: memref<1x16x16xf32, #tpu.memory_space<vmem>>, %arg5: memref<1x16x64xf32, #tpu.memory_space<vmem>>, %arg6: memref<16x32xbf16, #tpu.memory_space<vmem>>, %arg7: memref<16x32xbf16, #tpu.memory_space<vmem>>, %arg8: memref<3x32xf32, #tpu.memory_space<vmem>>, %arg9: memref<2x32x32xbf16, #tpu.memory_space<vmem>>, %arg10: memref<1x32x64xf32, #tpu.memory_space<vmem>>) attributes {dimension_semantics = [#tpu.dimension_semantics<parallel>, #tpu.dimension_semantics<parallel>], iteration_bounds = array<i64: 2, 1>, scalar_prefetch = 0 : i64, scratch_operands = 0 : i64, tpu.core_type = #tpu.core_type<tc>, window_params = [{transform_indices = @transform_0, window_bounds = array<i64: 1, 64, 3>}, {transform_indices = @transform_1, window_bounds = array<i64: 1, 3, 16>}, {transform_indices = @transform_2, window_bounds = array<i64: 1, 16, 16>}, {transform_indices = @transform_3, window_bounds = array<i64: 1, 16, 64>}, {pipeline_mode = #tpu.pipeline_mode<synchronous>, transform_indices = @transform_4, window_bounds = array<i64: 16, 32>}, {pipeline_mode = #tpu.pipeline_mode<synchronous>, transform_indices = @transform_5, window_bounds = array<i64: 16, 32>}, {pipeline_mode = #tpu.pipeline_mode<synchronous>, transform_indices = @transform_6, window_bounds = array<i64: 3, 32>}, {pipeline_mode = #tpu.pipeline_mode<synchronous>, transform_indices = @transform_7, window_bounds = array<i64: 2, 32, 32>}, {transform_indices = @transform_8, window_bounds = array<i64: 1, 32, 64>}]} {
    %c0 = arith.constant 0 : index
    %c0_0 = arith.constant 0 : index
    %c0_1 = arith.constant 0 : index
    %0 = vector.load %arg2[%c0, %c0_0, %c0_1] : memref<1x64x3xf32, #tpu.memory_space<vmem>>, vector<1x64x3xf32>
    %1 = vector.shape_cast %0 : vector<1x64x3xf32> to vector<64x3xf32>
    %c0_2 = arith.constant 0 : index
    %c0_3 = arith.constant 0 : index
    %c0_4 = arith.constant 0 : index
    %2 = vector.load %arg3[%c0_2, %c0_3, %c0_4] : memref<1x3x16xf32, #tpu.memory_space<vmem>>, vector<1x3x16xf32>
    %3 = vector.shape_cast %2 : vector<1x3x16xf32> to vector<3x16xf32>
    %cst = arith.constant 0.000000e+00 : f32
    %4 = vector.broadcast %cst : f32 to vector<64x16xf32>
    %5 = vector.extract_strided_slice %1 {offsets = [0, 0], sizes = [64, 1], strides = [1, 1]} : vector<64x3xf32> to vector<64x1xf32>
    %6 = vector.extract_strided_slice %3 {offsets = [0, 0], sizes = [1, 16], strides = [1, 1]} : vector<3x16xf32> to vector<1x16xf32>
    %7 = vector.broadcast %5 : vector<64x1xf32> to vector<64x16xf32>
    %8 = vector.broadcast %6 : vector<1x16xf32> to vector<64x16xf32>
    %9 = arith.subf %7, %8 : vector<64x16xf32>
    %10 = arith.mulf %9, %9 : vector<64x16xf32>
    %11 = arith.addf %4, %10 : vector<64x16xf32>
    %12 = vector.extract_strided_slice %1 {offsets = [0, 1], sizes = [64, 1], strides = [1, 1]} : vector<64x3xf32> to vector<64x1xf32>
    %13 = vector.extract_strided_slice %3 {offsets = [1, 0], sizes = [1, 16], strides = [1, 1]} : vector<3x16xf32> to vector<1x16xf32>
    %14 = vector.broadcast %12 : vector<64x1xf32> to vector<64x16xf32>
    %15 = vector.broadcast %13 : vector<1x16xf32> to vector<64x16xf32>
    %16 = arith.subf %14, %15 : vector<64x16xf32>
    %17 = arith.mulf %16, %16 : vector<64x16xf32>
    %18 = arith.addf %11, %17 : vector<64x16xf32>
    %19 = vector.extract_strided_slice %1 {offsets = [0, 2], sizes = [64, 1], strides = [1, 1]} : vector<64x3xf32> to vector<64x1xf32>
    %20 = vector.extract_strided_slice %3 {offsets = [2, 0], sizes = [1, 16], strides = [1, 1]} : vector<3x16xf32> to vector<1x16xf32>
    %21 = vector.broadcast %19 : vector<64x1xf32> to vector<64x16xf32>
    %22 = vector.broadcast %20 : vector<1x16xf32> to vector<64x16xf32>
    %23 = arith.subf %21, %22 : vector<64x16xf32>
    %24 = arith.mulf %23, %23 : vector<64x16xf32>
    %25 = arith.addf %18, %24 : vector<64x16xf32>
    %26 = tpu.iota {dimensions = array<i32: 1>} : vector<64x16xi32>
    %cst_5 = arith.constant 0.000000e+00 : f32
    %27 = vector.broadcast %cst_5 : f32 to vector<64x16xf32>
    %cst_6 = arith.constant 0.000000e+00 : f32
    %28 = vector.broadcast %cst_6 : f32 to vector<64x1xf32>
    %cst_7 = arith.constant dense<0x7F800000> : vector<64xf32>
    %29 = vector.multi_reduction <minimumf>, %25, %cst_7 [1] : vector<64x16xf32> to vector<64xf32>
    %30 = vector.shape_cast %29 : vector<64xf32> to vector<64x1xf32>
    %31 = vector.broadcast %30 : vector<64x1xf32> to vector<64x16xf32>
    %32 = arith.cmpf ole, %25, %31 : vector<64x16xf32>
    %c16_i32 = arith.constant 16 : i32
    %33 = vector.broadcast %c16_i32 : i32 to vector<64x16xi32>
    %34 = arith.select %32, %26, %33 : vector<64x16xi1>, vector<64x16xi32>
    %cst_8 = arith.constant dense<2147483647> : vector<64xi32>
    %35 = vector.multi_reduction <minsi>, %34, %cst_8 [1] : vector<64x16xi32> to vector<64xi32>
    %36 = vector.shape_cast %35 : vector<64xi32> to vector<64x1xi32>
    %37 = vector.broadcast %36 : vector<64x1xi32> to vector<64x16xi32>
    %38 = arith.cmpi eq, %26, %37 : vector<64x16xi32>
    %cst_9 = arith.constant 9.99999993E-9 : f32
    %39 = vector.broadcast %cst_9 : f32 to vector<64x1xf32>
    %40 = arith.addf %30, %39 : vector<64x1xf32>
    %cst_10 = arith.constant 1.000000e+00 : f32
    %41 = vector.broadcast %cst_10 : f32 to vector<64x1xf32>
    %42 = arith.divf %41, %40 : vector<64x1xf32>
    %cst_11 = arith.constant 0.000000e+00 : f32
    %43 = vector.shape_cast %42 : vector<64x1xf32> to vector<64x1xf32>
    %44 = vector.broadcast %43 : vector<64x1xf32> to vector<64x16xf32>
    %45 = vector.broadcast %cst_11 : f32 to vector<64x16xf32>
    %46 = arith.select %38, %44, %45 : vector<64x16xi1>, vector<64x16xf32>
    %47 = arith.addf %27, %46 : vector<64x16xf32>
    %48 = arith.addf %28, %42 : vector<64x1xf32>
    %cst_12 = arith.constant 0x7F800000 : f32
    %49 = vector.broadcast %cst_12 : f32 to vector<64x16xf32>
    %50 = arith.select %38, %49, %25 : vector<64x16xi1>, vector<64x16xf32>
    %cst_13 = arith.constant dense<0x7F800000> : vector<64xf32>
    %51 = vector.multi_reduction <minimumf>, %50, %cst_13 [1] : vector<64x16xf32> to vector<64xf32>
    %52 = vector.shape_cast %51 : vector<64xf32> to vector<64x1xf32>
    %53 = vector.broadcast %52 : vector<64x1xf32> to vector<64x16xf32>
    %54 = arith.cmpf ole, %50, %53 : vector<64x16xf32>
    %c16_i32_14 = arith.constant 16 : i32
    %55 = vector.broadcast %c16_i32_14 : i32 to vector<64x16xi32>
    %56 = arith.select %54, %26, %55 : vector<64x16xi1>, vector<64x16xi32>
    %cst_15 = arith.constant dense<2147483647> : vector<64xi32>
    %57 = vector.multi_reduction <minsi>, %56, %cst_15 [1] : vector<64x16xi32> to vector<64xi32>
    %58 = vector.shape_cast %57 : vector<64xi32> to vector<64x1xi32>
    %59 = vector.broadcast %58 : vector<64x1xi32> to vector<64x16xi32>
    %60 = arith.cmpi eq, %26, %59 : vector<64x16xi32>
    %cst_16 = arith.constant 9.99999993E-9 : f32
    %61 = vector.broadcast %cst_16 : f32 to vector<64x1xf32>
    %62 = arith.addf %52, %61 : vector<64x1xf32>
    %cst_17 = arith.constant 1.000000e+00 : f32
    %63 = vector.broadcast %cst_17 : f32 to vector<64x1xf32>
    %64 = arith.divf %63, %62 : vector<64x1xf32>
    %cst_18 = arith.constant 0.000000e+00 : f32
    %65 = vector.shape_cast %64 : vector<64x1xf32> to vector<64x1xf32>
    %66 = vector.broadcast %65 : vector<64x1xf32> to vector<64x16xf32>
    %67 = vector.broadcast %cst_18 : f32 to vector<64x16xf32>
    %68 = arith.select %60, %66, %67 : vector<64x16xi1>, vector<64x16xf32>
    %69 = arith.addf %47, %68 : vector<64x16xf32>
    %70 = arith.addf %48, %64 : vector<64x1xf32>
    %cst_19 = arith.constant 0x7F800000 : f32
    %71 = vector.broadcast %cst_19 : f32 to vector<64x16xf32>
    %72 = arith.select %60, %71, %50 : vector<64x16xi1>, vector<64x16xf32>
    %cst_20 = arith.constant dense<0x7F800000> : vector<64xf32>
    %73 = vector.multi_reduction <minimumf>, %72, %cst_20 [1] : vector<64x16xf32> to vector<64xf32>
    %74 = vector.shape_cast %73 : vector<64xf32> to vector<64x1xf32>
    %75 = vector.broadcast %74 : vector<64x1xf32> to vector<64x16xf32>
    %76 = arith.cmpf ole, %72, %75 : vector<64x16xf32>
    %c16_i32_21 = arith.constant 16 : i32
    %77 = vector.broadcast %c16_i32_21 : i32 to vector<64x16xi32>
    %78 = arith.select %76, %26, %77 : vector<64x16xi1>, vector<64x16xi32>
    %cst_22 = arith.constant dense<2147483647> : vector<64xi32>
    %79 = vector.multi_reduction <minsi>, %78, %cst_22 [1] : vector<64x16xi32> to vector<64xi32>
    %80 = vector.shape_cast %79 : vector<64xi32> to vector<64x1xi32>
    %81 = vector.broadcast %80 : vector<64x1xi32> to vector<64x16xi32>
    %82 = arith.cmpi eq, %26, %81 : vector<64x16xi32>
    %cst_23 = arith.constant 9.99999993E-9 : f32
    %83 = vector.broadcast %cst_23 : f32 to vector<64x1xf32>
    %84 = arith.addf %74, %83 : vector<64x1xf32>
    %cst_24 = arith.constant 1.000000e+00 : f32
    %85 = vector.broadcast %cst_24 : f32 to vector<64x1xf32>
    %86 = arith.divf %85, %84 : vector<64x1xf32>
    %cst_25 = arith.constant 0.000000e+00 : f32
    %87 = vector.shape_cast %86 : vector<64x1xf32> to vector<64x1xf32>
    %88 = vector.broadcast %87 : vector<64x1xf32> to vector<64x16xf32>
    %89 = vector.broadcast %cst_25 : f32 to vector<64x16xf32>
    %90 = arith.select %82, %88, %89 : vector<64x16xi1>, vector<64x16xf32>
    %91 = arith.addf %69, %90 : vector<64x16xf32>
    %92 = arith.addf %70, %86 : vector<64x1xf32>
    %c0_26 = arith.constant 0 : index
    %c0_27 = arith.constant 0 : index
    %c0_28 = arith.constant 0 : index
    %93 = vector.load %arg4[%c0_26, %c0_27, %c0_28] : memref<1x16x16xf32, #tpu.memory_space<vmem>>, vector<1x16x16xf32>
    %94 = vector.shape_cast %93 : vector<1x16x16xf32> to vector<16x16xf32>
    %cst_29 = arith.constant dense<0.000000e+00> : vector<64x16xf32>
    %95 = tpu.matmul %91, %94, %cst_29 {dimension_numbers = #tpu.dot_dimension_numbers<[1], [0], [0], [1], [0, 0, 1, 1], [], []>} : vector<64x16xf32>, vector<16x16xf32>, vector<64x16xf32> -> vector<64x16xf32>
    %96 = tpu.reciprocal %92 {approx = true} : vector<64x1xf32> -> vector<64x1xf32>
    %97 = vector.broadcast %96 : vector<64x1xf32> to vector<64x16xf32>
    %98 = arith.mulf %95, %97 : vector<64x16xf32>
    %c0_30 = arith.constant 0 : index
    %c0_31 = arith.constant 0 : index
    %99 = vector.load %arg8[%c0_30, %c0_31] : memref<3x32xf32, #tpu.memory_space<vmem>>, vector<3x32xf32>
    %100 = arith.truncf %98 : vector<64x16xf32> to vector<64x16xbf16>
    %c0_32 = arith.constant 0 : index
    %c0_33 = arith.constant 0 : index
    %101 = vector.load %arg7[%c0_32, %c0_33] : memref<16x32xbf16, #tpu.memory_space<vmem>>, vector<16x32xbf16>
    %cst_34 = arith.constant dense<0.000000e+00> : vector<64x32xf32>
    %102 = tpu.matmul %100, %101, %cst_34 {dimension_numbers = #tpu.dot_dimension_numbers<[1], [0], [0], [1], [0, 0, 1, 1], [], []>} : vector<64x16xbf16>, vector<16x32xbf16>, vector<64x32xf32> -> vector<64x32xf32>
    %c0_35 = arith.constant 0 : index
    %c0_36 = arith.constant 0 : index
    %c0_37 = arith.constant 0 : index
    %103 = vector.load %arg5[%c0_35, %c0_36, %c0_37] : memref<1x16x64xf32, #tpu.memory_space<vmem>>, vector<1x16x64xf32>
    %104 = vector.shape_cast %103 : vector<1x16x64xf32> to vector<16x64xf32>
    %105 = tpu.transpose %104, [1, 0] : vector<16x64xf32> -> vector<64x16xf32>
    %106 = arith.truncf %105 : vector<64x16xf32> to vector<64x16xbf16>
    %c0_38 = arith.constant 0 : index
    %c0_39 = arith.constant 0 : index
    %107 = vector.load %arg6[%c0_38, %c0_39] : memref<16x32xbf16, #tpu.memory_space<vmem>>, vector<16x32xbf16>
    %cst_40 = arith.constant dense<0.000000e+00> : vector<64x32xf32>
    %108 = tpu.matmul %106, %107, %cst_40 {dimension_numbers = #tpu.dot_dimension_numbers<[1], [0], [0], [1], [0, 0, 1, 1], [], []>} : vector<64x16xbf16>, vector<16x32xbf16>, vector<64x32xf32> -> vector<64x32xf32>
    %109 = arith.addf %102, %108 : vector<64x32xf32>
    %110 = vector.extract_strided_slice %99 {offsets = [0, 0], sizes = [1, 32], strides = [1, 1]} : vector<3x32xf32> to vector<1x32xf32>
    %111 = vector.broadcast %110 : vector<1x32xf32> to vector<64x32xf32>
    %112 = arith.addf %109, %111 : vector<64x32xf32>
    %cst_41 = arith.constant 5.000000e-01 : f32
    %113 = vector.broadcast %cst_41 : f32 to vector<64x32xf32>
    %114 = arith.mulf %113, %112 : vector<64x32xf32>
    %cst_42 = arith.constant 4.471500e-02 : f32
    %115 = vector.broadcast %cst_42 : f32 to vector<64x32xf32>
    %116 = arith.mulf %115, %112 : vector<64x32xf32>
    %117 = arith.mulf %116, %112 : vector<64x32xf32>
    %118 = arith.mulf %117, %112 : vector<64x32xf32>
    %119 = arith.addf %112, %118 : vector<64x32xf32>
    %cst_43 = arith.constant 0.797884583 : f32
    %120 = vector.broadcast %cst_43 : f32 to vector<64x32xf32>
    %121 = arith.mulf %120, %119 : vector<64x32xf32>
    %122 = math.tanh %121 : vector<64x32xf32>
    %cst_44 = arith.constant 1.000000e+00 : f32
    %123 = vector.broadcast %cst_44 : f32 to vector<64x32xf32>
    %124 = arith.addf %123, %122 : vector<64x32xf32>
    %125 = arith.mulf %114, %124 : vector<64x32xf32>
    %c0_45 = arith.constant 0 : index
    %c0_46 = arith.constant 0 : index
    %c0_47 = arith.constant 0 : index
    %126 = vector.load %arg9[%c0_45, %c0_46, %c0_47] : memref<2x32x32xbf16, #tpu.memory_space<vmem>>, vector<1x32x32xbf16>
    %127 = vector.shape_cast %126 : vector<1x32x32xbf16> to vector<32x32xbf16>
    %c1 = arith.constant 1 : index
    %c0_48 = arith.constant 0 : index
    %c0_49 = arith.constant 0 : index
    %128 = vector.load %arg9[%c1, %c0_48, %c0_49] : memref<2x32x32xbf16, #tpu.memory_space<vmem>>, vector<1x32x32xbf16>
    %129 = vector.shape_cast %128 : vector<1x32x32xbf16> to vector<32x32xbf16>
    %130 = arith.truncf %125 : vector<64x32xf32> to vector<64x32xbf16>
    %cst_50 = arith.constant dense<0.000000e+00> : vector<64x32xf32>
    %131 = tpu.matmul %130, %127, %cst_50 {dimension_numbers = #tpu.dot_dimension_numbers<[1], [0], [0], [1], [0, 0, 1, 1], [], []>} : vector<64x32xbf16>, vector<32x32xbf16>, vector<64x32xf32> -> vector<64x32xf32>
    %132 = vector.extract_strided_slice %99 {offsets = [1, 0], sizes = [1, 32], strides = [1, 1]} : vector<3x32xf32> to vector<1x32xf32>
    %133 = vector.broadcast %132 : vector<1x32xf32> to vector<64x32xf32>
    %134 = arith.addf %131, %133 : vector<64x32xf32>
    %cst_51 = arith.constant 5.000000e-01 : f32
    %135 = vector.broadcast %cst_51 : f32 to vector<64x32xf32>
    %136 = arith.mulf %135, %134 : vector<64x32xf32>
    %cst_52 = arith.constant 4.471500e-02 : f32
    %137 = vector.broadcast %cst_52 : f32 to vector<64x32xf32>
    %138 = arith.mulf %137, %134 : vector<64x32xf32>
    %139 = arith.mulf %138, %134 : vector<64x32xf32>
    %140 = arith.mulf %139, %134 : vector<64x32xf32>
    %141 = arith.addf %134, %140 : vector<64x32xf32>
    %cst_53 = arith.constant 0.797884583 : f32
    %142 = vector.broadcast %cst_53 : f32 to vector<64x32xf32>
    %143 = arith.mulf %142, %141 : vector<64x32xf32>
    %144 = math.tanh %143 : vector<64x32xf32>
    %cst_54 = arith.constant 1.000000e+00 : f32
    %145 = vector.broadcast %cst_54 : f32 to vector<64x32xf32>
    %146 = arith.addf %145, %144 : vector<64x32xf32>
    %147 = arith.mulf %136, %146 : vector<64x32xf32>
    %148 = arith.truncf %147 : vector<64x32xf32> to vector<64x32xbf16>
    %cst_55 = arith.constant dense<0.000000e+00> : vector<64x32xf32>
    %149 = tpu.matmul %148, %129, %cst_55 {dimension_numbers = #tpu.dot_dimension_numbers<[1], [0], [0], [1], [0, 0, 1, 1], [], []>} : vector<64x32xbf16>, vector<32x32xbf16>, vector<64x32xf32> -> vector<64x32xf32>
    %150 = vector.extract_strided_slice %99 {offsets = [2, 0], sizes = [1, 32], strides = [1, 1]} : vector<3x32xf32> to vector<1x32xf32>
    %151 = vector.broadcast %150 : vector<1x32xf32> to vector<64x32xf32>
    %152 = arith.addf %149, %151 : vector<64x32xf32>
    %153 = arith.addf %152, %125 : vector<64x32xf32>
    %cst_56 = arith.constant 5.000000e-01 : f32
    %154 = vector.broadcast %cst_56 : f32 to vector<64x32xf32>
    %155 = arith.mulf %154, %153 : vector<64x32xf32>
    %cst_57 = arith.constant 4.471500e-02 : f32
    %156 = vector.broadcast %cst_57 : f32 to vector<64x32xf32>
    %157 = arith.mulf %156, %153 : vector<64x32xf32>
    %158 = arith.mulf %157, %153 : vector<64x32xf32>
    %159 = arith.mulf %158, %153 : vector<64x32xf32>
    %160 = arith.addf %153, %159 : vector<64x32xf32>
    %cst_58 = arith.constant 0.797884583 : f32
    %161 = vector.broadcast %cst_58 : f32 to vector<64x32xf32>
    %162 = arith.mulf %161, %160 : vector<64x32xf32>
    %163 = math.tanh %162 : vector<64x32xf32>
    %cst_59 = arith.constant 1.000000e+00 : f32
    %164 = vector.broadcast %cst_59 : f32 to vector<64x32xf32>
    %165 = arith.addf %164, %163 : vector<64x32xf32>
    %166 = arith.mulf %155, %165 : vector<64x32xf32>
    %167 = tpu.transpose %166, [1, 0] : vector<64x32xf32> -> vector<32x64xf32>
    %c0_60 = arith.constant 0 : index
    %c0_61 = arith.constant 0 : index
    %c0_62 = arith.constant 0 : index
    %168 = vector.load %arg10[%c0_60, %c0_61, %c0_62] : memref<1x32x64xf32, #tpu.memory_space<vmem>>, vector<1x32x64xf32>
    %169 = vector.shape_cast %168 : vector<1x32x64xf32> to vector<32x64xf32>
    %170 = vector.shape_cast %167 : vector<32x64xf32> to vector<1x32x64xf32>
    tpu.vector_store %arg10[%c0_60, %c0_61, %c0_62], %170 {strides = array<i32>} : memref<1x32x64xf32, #tpu.memory_space<vmem>>, vector<1x32x64xf32>,
    return
  }
  func.func @transform_0(%arg0: i32, %arg1: i32) -> (i32, i32, i32) {
    %c0_i32 = arith.constant 0 : i32
    %c0_i32_0 = arith.constant 0 : i32
    return %arg0, %arg1, %c0_i32 : i32, i32, i32
  }
  func.func @transform_1(%arg0: i32, %arg1: i32) -> (i32, i32, i32) {
    %c0_i32 = arith.constant 0 : i32
    %c0_i32_0 = arith.constant 0 : i32
    %c0_i32_1 = arith.constant 0 : i32
    return %arg0, %c0_i32, %c0_i32_0 : i32, i32, i32
  }
  func.func @transform_2(%arg0: i32, %arg1: i32) -> (i32, i32, i32) {
    %c0_i32 = arith.constant 0 : i32
    %c0_i32_0 = arith.constant 0 : i32
    %c0_i32_1 = arith.constant 0 : i32
    return %arg0, %c0_i32, %c0_i32_0 : i32, i32, i32
  }
  func.func @transform_3(%arg0: i32, %arg1: i32) -> (i32, i32, i32) {
    %c0_i32 = arith.constant 0 : i32
    %c0_i32_0 = arith.constant 0 : i32
    return %arg0, %c0_i32, %arg1 : i32, i32, i32
  }
  func.func @transform_4(%arg0: i32, %arg1: i32) -> (i32, i32) {
    %c0_i32 = arith.constant 0 : i32
    %c0_i32_0 = arith.constant 0 : i32
    %c0_i32_1 = arith.constant 0 : i32
    return %c0_i32, %c0_i32_0 : i32, i32
  }
  func.func @transform_5(%arg0: i32, %arg1: i32) -> (i32, i32) {
    %c0_i32 = arith.constant 0 : i32
    %c0_i32_0 = arith.constant 0 : i32
    %c0_i32_1 = arith.constant 0 : i32
    return %c0_i32, %c0_i32_0 : i32, i32
  }
  func.func @transform_6(%arg0: i32, %arg1: i32) -> (i32, i32) {
    %c0_i32 = arith.constant 0 : i32
    %c0_i32_0 = arith.constant 0 : i32
    %c0_i32_1 = arith.constant 0 : i32
    return %c0_i32, %c0_i32_0 : i32, i32
  }
  func.func @transform_7(%arg0: i32, %arg1: i32) -> (i32, i32, i32) {
    %c0_i32 = arith.constant 0 : i32
    %c0_i32_0 = arith.constant 0 : i32
    %c0_i32_1 = arith.constant 0 : i32
    %c0_i32_2 = arith.constant 0 : i32
    return %c0_i32, %c0_i32_0, %c0_i32_1 : i32, i32, i32
  }
  func.func @transform_8(%arg0: i32, %arg1: i32) -> (i32, i32, i32) {
    %c0_i32 = arith.constant 0 : i32
    %c0_i32_0 = arith.constant 0 : i32
    return %arg0, %c0_i32, %arg1 : i32, i32, i32
  }
}

</mosaic_0001>

<llo_original>
// kernel: feature_propagation_forward.1
$region0: #{feature_propagation_forward.1}
  #allocation0 [shape = 'u32[]', space=smem, size = 0x4, offset = 0x4, fixed_abs, tag = 'smem constant byte address 0x4 - core index']
  #allocation1 [shape = 'u32[144,128]{1,0:T(1,128)}', space=vmem, size = 0x12000, scoped, tag = 'internal scratch']
  %s0 = inlined_call_operand.vmem [shape: f32[2,64,3], index: 0, kind: input, shape index: {}]
  %s1 = inlined_call_operand.vmem [shape: f32[2,3,16], index: 1, kind: input, shape index: {}]
  %s2 = inlined_call_operand.vmem [shape: f32[2,16,16], index: 2, kind: input, shape index: {}]
  %s3 = inlined_call_operand.vmem [shape: f32[2,16,64], index: 3, kind: input, shape index: {}]
  %s4 = inlined_call_operand.vmem [shape: bf16[16,32], index: 4, kind: input, shape index: {}]
  %s5 = inlined_call_operand.vmem [shape: bf16[16,32], index: 5, kind: input, shape index: {}]
  %s6 = inlined_call_operand.vmem [shape: f32[3,32], index: 6, kind: input, shape index: {}]
  %s7 = inlined_call_operand.vmem [shape: bf16[2,32,32], index: 7, kind: input, shape index: {}]
  %s8 = inlined_call_operand.hbm [shape: f32[2,32,64], index: 8, kind: output, shape index: {}]
  %s9 = sld [smem:[#allocation0]]
  $region65: #{feature_propagation_forward.1} parent=0
    _
  %s11 = ssub.s32 1, %s9
  %s12 = scalar_select 0, %s11, %s9
  $region1: #{feature_propagation_forward.1} parent=0
    #allocation2 [shape = 'u8[32768]{0}', space=vmem, size = 0x8000, scoped, tag = 'output window, operand 0']
    #allocation3 [shape = 's32[2]{0}', space=sflag, size = 0x8, scoped, tag = 'scoped memory for feature_propagation_forward.1']
    %13 = vsyncpa [#allocation3], 0
    %s14 = scalar_lea.sflag [#allocation3], 1
    %15 = vsyncpa %s14, 0
    loop: start=0, step=1, limit=4
    $region2: #{feature_propagation_forward.1} parent=1 // loop_pre_header
      _
    $region3: #{feature_propagation_forward.1} parent=1 // loop_header
      %s17 = sphi 0, %s21
      %p18 = scmp.ge.s32.totalorder %s17, 4
      %s24 = sphi 0, %s36
      %s25 = sphi 0, %s32
      %s26 = sphi 0, %s24
      %s27 = sphi 0, %s25
      %s28 = sphi 0, %s26
      %s29 = sphi 0, %s27
      %s41 = sphi 0, %s43
      %s44 = sphi 0, %s41
      %s45 = sphi 0, %s44
      %s61 = sphi 0, %s45
      %s67 = sphi 0, %s69
      %s70 = sphi 0, %s67
      %s71 = sphi 0, %s70
      %s87 = sphi 0, %s71
      %s93 = sphi 0, %s95
      %s96 = sphi 0, %s93
      %s97 = sphi 0, %s96
      %s113 = sphi 0, %s97
      %s121 = sphi 0, %s123
      %s124 = sphi 0, %s121
      %s125 = sphi 0, %s124
      %s141 = sphi 0, %s125
      %s145 = sphi 0, %s145
      %s147 = sphi 0, %s145
      %s148 = sphi 0, %s147
      %s162 = sphi 0, %s148
      %s166 = sphi 0, %s166
      %s168 = sphi 0, %s166
      %s169 = sphi 0, %s168
      %s183 = sphi 0, %s169
      %s187 = sphi 0, %s187
      %s189 = sphi 0, %s187
      %s190 = sphi 0, %s189
      %s204 = sphi 0, %s190
      %s208 = sphi 0, %s208
      %s210 = sphi 0, %s208
      %s211 = sphi 0, %s210
      %s225 = sphi 0, %s211
      %s233 = sphi 0, %s235
      %s236 = sphi 0, %s233
      %s237 = sphi 0, %s236
      %s253 = sphi 0, %s237
    $region4: #{feature_propagation_forward.1} parent=1 // loop_header_branch
      %20 = sbr.rel (%p18) target = $region8
    $region5: #{feature_propagation_forward.1} parent=1 // loop_body
      %s22 = ssub.s32 %s17, 1
      %s23 = ssub.s32 %s17, 2
      %s30 = sadd.s32 1, %s25
      %p31 = scmp.ge.s32.totalorder %s30, 1
      %s32 = scalar_select %p31, 0, %s30
      %s33 = sadd.s32 1, %s24
      %s34 = scalar_select %p31, %s33, %s24
      %p35 = scmp.ge.s32.totalorder %s34, 2
      %s36 = scalar_select %p35, 0, %s34
      %s37 = ssub.s32 %s24, %s36
      %s38 = ssub.s32 %s25, %s32
      %s39 = sor.u32 %s37, %s38
      %p40 = scmp.eq.s32.totalorder %s39, 0
      %s42 = sadd.s32 %s41, 1
      %s43 = scalar_select %p40, %s41, %s42
      %p46 = pneg %p40
      %p47 = scmp.eq.s32.totalorder %s17, 1
      %p48 = por %p46, %p47
      %p49 = scmp.ne.s32.totalorder %s41, %s44
      %p50 = scmp.eq.s32.totalorder %s17, 0
      %p51 = por %p49, %p50
      %p52 = scmp.ne.s32.totalorder %s41, %s44
      %p53 = scmp.eq.s32.totalorder %s22, 1
      %p54 = por %p52, %p53
      %p55 = scmp.ne.s32.totalorder %s44, %s45
      %p56 = scmp.eq.s32.totalorder %s22, 0
      %p57 = por %p55, %p56
      %p58 = scmp.ne.s32.totalorder %s44, %s45
      %p59 = scmp.eq.s32.totalorder %s23, 1
      %p60 = por %p58, %p59
      %p62 = scmp.ne.s32.totalorder %s45, %s61
      %p63 = scmp.eq.s32.totalorder %s23, 0
      %p64 = por %p62, %p63
      %s65 = ssub.s32 %s24, %s36
      %p66 = scmp.eq.s32.totalorder %s65, 0
      %s68 = sadd.s32 %s67, 1
      %s69 = scalar_select %p66, %s67, %s68
      %p72 = pneg %p66
      %p73 = scmp.eq.s32.totalorder %s17, 1
      %p74 = por %p72, %p73
      %p75 = scmp.ne.s32.totalorder %s67, %s70
      %p76 = scmp.eq.s32.totalorder %s17, 0
      %p77 = por %p75, %p76
      %p78 = scmp.ne.s32.totalorder %s67, %s70
      %p79 = scmp.eq.s32.totalorder %s22, 1
      %p80 = por %p78, %p79
      %p81 = scmp.ne.s32.totalorder %s70, %s71
      %p82 = scmp.eq.s32.totalorder %s22, 0
      %p83 = por %p81, %p82
      %p84 = scmp.ne.s32.totalorder %s70, %s71
      %p85 = scmp.eq.s32.totalorder %s23, 1
      %p86 = por %p84, %p85
      %p88 = scmp.ne.s32.totalorder %s71, %s87
      %p89 = scmp.eq.s32.totalorder %s23, 0
      %p90 = por %p88, %p89
      %s91 = ssub.s32 %s24, %s36
      %p92 = scmp.eq.s32.totalorder %s91, 0
      %s94 = sadd.s32 %s93, 1
      %s95 = scalar_select %p92, %s93, %s94
      %p98 = pneg %p92
      %p99 = scmp.eq.s32.totalorder %s17, 1
      %p100 = por %p98, %p99
      %p101 = scmp.ne.s32.totalorder %s93, %s96
      %p102 = scmp.eq.s32.totalorder %s17, 0
      %p103 = por %p101, %p102
      %p104 = scmp.ne.s32.totalorder %s93, %s96
      %p105 = scmp.eq.s32.totalorder %s22, 1
      %p106 = por %p104, %p105
      %p107 = scmp.ne.s32.totalorder %s96, %s97
      %p108 = scmp.eq.s32.totalorder %s22, 0
      %p109 = por %p107, %p108
      %p110 = scmp.ne.s32.totalorder %s96, %s97
      %p111 = scmp.eq.s32.totalorder %s23, 1
      %p112 = por %p110, %p111
      %p114 = scmp.ne.s32.totalorder %s97, %s113
      %p115 = scmp.eq.s32.totalorder %s23, 0
      %p116 = por %p114, %p115
      %s117 = ssub.s32 %s24, %s36
      %s118 = ssub.s32 %s25, %s32
      %s119 = sor.u32 %s117, %s118
      %p120 = scmp.eq.s32.totalorder %s119, 0
      %s122 = sadd.s32 %s121, 1
      %s123 = scalar_select %p120, %s121, %s122
      %p126 = pneg %p120
      %p127 = scmp.eq.s32.totalorder %s17, 1
      %p128 = por %p126, %p127
      %p129 = scmp.ne.s32.totalorder %s121, %s124
      %p130 = scmp.eq.s32.totalorder %s17, 0
      %p131 = por %p129, %p130
      %p132 = scmp.ne.s32.totalorder %s121, %s124
      %p133 = scmp.eq.s32.totalorder %s22, 1
      %p134 = por %p132, %p133
      %p135 = scmp.ne.s32.totalorder %s124, %s125
      %p136 = scmp.eq.s32.totalorder %s22, 0
      %p137 = por %p135, %p136
      %p138 = scmp.ne.s32.totalorder %s124, %s125
      %p139 = scmp.eq.s32.totalorder %s23, 1
      %p140 = por %p138, %p139
      %p142 = scmp.ne.s32.totalorder %s125, %s141
      %p143 = scmp.eq.s32.totalorder %s23, 0
      %p144 = por %p142, %p143
      %s146 = sadd.s32 %s145, 1
      %p149 = scmp.eq.s32.totalorder %s17, 1
      %p150 = scmp.ne.s32.totalorder %s145, %s147
      %p151 = scmp.eq.s32.totalorder %s17, 0
      %p152 = por %p150, %p151
      %p153 = scmp.ne.s32.totalorder %s145, %s147
      %p154 = scmp.eq.s32.totalorder %s22, 1
      %p155 = por %p153, %p154
      %p156 = scmp.ne.s32.totalorder %s147, %s148
      %p157 = scmp.eq.s32.totalorder %s22, 0
      %p158 = por %p156, %p157
      %p159 = scmp.ne.s32.totalorder %s147, %s148
      %p160 = scmp.eq.s32.totalorder %s23, 1
      %p161 = por %p159, %p160
      %p163 = scmp.ne.s32.totalorder %s148, %s162
      %p164 = scmp.eq.s32.totalorder %s23, 0
      %p165 = por %p163, %p164
      %s167 = sadd.s32 %s166, 1
      %p170 = scmp.eq.s32.totalorder %s17, 1
      %p171 = scmp.ne.s32.totalorder %s166, %s168
      %p172 = scmp.eq.s32.totalorder %s17, 0
      %p173 = por %p171, %p172
      %p174 = scmp.ne.s32.totalorder %s166, %s168
      %p175 = scmp.eq.s32.totalorder %s22, 1
      %p176 = por %p174, %p175
      %p177 = scmp.ne.s32.totalorder %s168, %s169
      %p178 = scmp.eq.s32.totalorder %s22, 0
      %p179 = por %p177, %p178
      %p180 = scmp.ne.s32.totalorder %s168, %s169
      %p181 = scmp.eq.s32.totalorder %s23, 1
      %p182 = por %p180, %p181
      %p184 = scmp.ne.s32.totalorder %s169, %s183
      %p185 = scmp.eq.s32.totalorder %s23, 0
      %p186 = por %p184, %p185
      %s188 = sadd.s32 %s187, 1
      %p191 = scmp.eq.s32.totalorder %s17, 1
      %p192 = scmp.ne.s32.totalorder %s187, %s189
      %p193 = scmp.eq.s32.totalorder %s17, 0
      %p194 = por %p192, %p193
      %p195 = scmp.ne.s32.totalorder %s187, %s189
      %p196 = scmp.eq.s32.totalorder %s22, 1
      %p197 = por %p195, %p196
      %p198 = scmp.ne.s32.totalorder %s189, %s190
      %p199 = scmp.eq.s32.totalorder %s22, 0
      %p200 = por %p198, %p199
      %p201 = scmp.ne.s32.totalorder %s189, %s190
      %p202 = scmp.eq.s32.totalorder %s23, 1
      %p203 = por %p201, %p202
      %p205 = scmp.ne.s32.totalorder %s190, %s204
      %p206 = scmp.eq.s32.totalorder %s23, 0
      %p207 = por %p205, %p206
      %s209 = sadd.s32 %s208, 1
      %p212 = scmp.eq.s32.totalorder %s17, 1
      %p213 = scmp.ne.s32.totalorder %s208, %s210
      %p214 = scmp.eq.s32.totalorder %s17, 0
      %p215 = por %p213, %p214
      %p216 = scmp.ne.s32.totalorder %s208, %s210
      %p217 = scmp.eq.s32.totalorder %s22, 1
      %p218 = por %p216, %p217
      %p219 = scmp.ne.s32.totalorder %s210, %s211
      %p220 = scmp.eq.s32.totalorder %s22, 0
      %p221 = por %p219, %p220
      %p222 = scmp.ne.s32.totalorder %s210, %s211
      %p223 = scmp.eq.s32.totalorder %s23, 1
      %p224 = por %p222, %p223
      %p226 = scmp.ne.s32.totalorder %s211, %s225
      %p227 = scmp.eq.s32.totalorder %s23, 0
      %p228 = por %p226, %p227
      %s229 = ssub.s32 %s24, %s36
      %s230 = ssub.s32 %s25, %s32
      %s231 = sor.u32 %s229, %s230
      %p232 = scmp.eq.s32.totalorder %s231, 0
      %s234 = sadd.s32 %s233, 1
      %s235 = scalar_select %p232, %s233, %s234
      %p238 = pneg %p232
      %p239 = scmp.eq.s32.totalorder %s17, 1
      %p240 = por %p238, %p239
      %p241 = scmp.ne.s32.totalorder %s233, %s236
      %p242 = scmp.eq.s32.totalorder %s17, 0
      %p243 = por %p241, %p242
      %p244 = scmp.ne.s32.totalorder %s233, %s236
      %p245 = scmp.eq.s32.totalorder %s22, 1
      %p246 = por %p244, %p245
      %p247 = scmp.ne.s32.totalorder %s236, %s237
      %p248 = scmp.eq.s32.totalorder %s22, 0
      %p249 = por %p247, %p248
      %p250 = scmp.ne.s32.totalorder %s236, %s237
      %p251 = scmp.eq.s32.totalorder %s23, 1
      %p252 = por %p250, %p251
      %p254 = scmp.ne.s32.totalorder %s237, %s253
      %p255 = scmp.eq.s32.totalorder %s23, 0
      %p256 = por %p254, %p255
      %p257 = scmp.le.s32.totalorder 1, %s17
      %p258 = scmp.lt.s32.totalorder %s17, 3
      %p259 = pnand %p257, %p258
      %p260 = pneg %p259
      // Predicated region
      $region9: #{feature_propagation_forward.1} parent=5 // pred_check
        _
      $region10: #{feature_propagation_forward.1} parent=5 // pred_check_branch
        %262 = sbr.rel (%p259) target = $region12
      $region11: #{feature_propagation_forward.1} parent=5 // pred_region
        %s263 = ssub.s32 %s17, 1
        // Predicated region
        $region13: #{feature_propagation_forward.1} parent=11 // pred_check
          %p264 = pneg %p158
        $region14: #{feature_propagation_forward.1} parent=11 // pred_check_branch
          %266 = sbr.rel (%p264) target = $region16
        $region15: #{feature_propagation_forward.1} parent=11 // pred_region
          _
        $region16: #{feature_propagation_forward.1} parent=11 // pred_fallthru
          _
        // Predicated region
        $region17: #{feature_propagation_forward.1} parent=11 // pred_check
          %p267 = pneg %p179
        $region18: #{feature_propagation_forward.1} parent=11 // pred_check_branch
          %269 = sbr.rel (%p267) target = $region20
        $region19: #{feature_propagation_forward.1} parent=11 // pred_region
          _
        $region20: #{feature_propagation_forward.1} parent=11 // pred_fallthru
          _
        // Predicated region
        $region21: #{feature_propagation_forward.1} parent=11 // pred_check
          %p270 = pneg %p200
        $region22: #{feature_propagation_forward.1} parent=11 // pred_check_branch
          %272 = sbr.rel (%p270) target = $region24
        $region23: #{feature_propagation_forward.1} parent=11 // pred_region
          _
        $region24: #{feature_propagation_forward.1} parent=11 // pred_fallthru
          _
        // Predicated region
        $region25: #{feature_propagation_forward.1} parent=11 // pred_check
          %p273 = pneg %p221
        $region26: #{feature_propagation_forward.1} parent=11 // pred_check_branch
          %275 = sbr.rel (%p273) target = $region28
        $region27: #{feature_propagation_forward.1} parent=11 // pred_region
          _
        $region28: #{feature_propagation_forward.1} parent=11 // pred_fallthru
          _
      $region12: #{feature_propagation_forward.1} parent=5 // pred_fallthru
        _
      %p276 = scmp.lt.s32.totalorder %s17, 2
      // Predicated region
      $region29: #{feature_propagation_forward.1} parent=5 // pred_check
        %p277 = pneg %p276
      $region30: #{feature_propagation_forward.1} parent=5 // pred_check_branch
        %279 = sbr.rel (%p277) target = $region32
      $region31: #{feature_propagation_forward.1} parent=5 // pred_region
        // Predicated region
        $region33: #{feature_propagation_forward.1} parent=31 // pred_check
          %p280 = pneg %p51
        $region34: #{feature_propagation_forward.1} parent=31 // pred_check_branch
          %282 = sbr.rel (%p280) target = $region36
        $region35: #{feature_propagation_forward.1} parent=31 // pred_region
          %s283 = smul.u32 8, %s25
          %p284 = scmp.lt.s32.totalorder %s24, 1
          %s285 = scalar_select %p284, %s24, 1
          %p286 = scmp.lt.s32.totalorder %s283, 7
          %s287 = scalar_select %p286, %s283, 7
          %s288 = smul.addr %s285, 8
          %s289 = sadd.s32 %s287, %s288
          %s290 = smul.addr %s289, 8
          %s291 = scalar_lea.vmem %s0, %s290
          %s292 = smul.u32 8, %s25
        $region36: #{feature_propagation_forward.1} parent=31 // pred_fallthru
          _
        // Predicated region
        $region37: #{feature_propagation_forward.1} parent=31 // pred_check
          %p293 = pneg %p77
        $region38: #{feature_propagation_forward.1} parent=31 // pred_check_branch
          %295 = sbr.rel (%p293) target = $region40
        $region39: #{feature_propagation_forward.1} parent=31 // pred_region
          %p296 = scmp.lt.s32.totalorder %s24, 1
          %s297 = scalar_select %p296, %s24, 1
          %s298 = smul.addr %s297, 4
          %s299 = scalar_lea.vmem %s1, %s298
        $region40: #{feature_propagation_forward.1} parent=31 // pred_fallthru
          _
        // Predicated region
        $region41: #{feature_propagation_forward.1} parent=31 // pred_check
          %p300 = pneg %p103
        $region42: #{feature_propagation_forward.1} parent=31 // pred_check_branch
          %302 = sbr.rel (%p300) target = $region44
        $region43: #{feature_propagation_forward.1} parent=31 // pred_region
          %p303 = scmp.lt.s32.totalorder %s24, 1
          %s304 = scalar_select %p303, %s24, 1
          %s305 = smul.addr %s304, 2
          %s306 = smul.addr %s305, 8
          %s307 = scalar_lea.vmem %s2, %s306
        $region44: #{feature_propagation_forward.1} parent=31 // pred_fallthru
          _
        // Predicated region
        $region45: #{feature_propagation_forward.1} parent=31 // pred_check
          %p308 = pneg %p131
        $region46: #{feature_propagation_forward.1} parent=31 // pred_check_branch
          %310 = sbr.rel (%p308) target = $region48
        $region47: #{feature_propagation_forward.1} parent=31 // pred_region
          %p311 = scmp.lt.s32.totalorder %s24, 1
          %s312 = scalar_select %p311, %s24, 1
          %p313 = scmp.lt.s32.totalorder %s25, 0
          %s314 = scalar_select %p313, %s25, 0
          %s315 = smul.addr %s312, 2
          %s316 = sadd.s32 %s314, %s315
          %s317 = smul.addr %s316, 8
          %s318 = scalar_lea.vmem %s3, %s317
        $region48: #{feature_propagation_forward.1} parent=31 // pred_fallthru
          _
      $region32: #{feature_propagation_forward.1} parent=5 // pred_fallthru
        _
      %p319 = scmp.le.s32.totalorder 1, %s17
      %p320 = scmp.lt.s32.totalorder %s17, 3
      %p321 = pnand %p319, %p320
      %p322 = pneg %p321
      // Predicated region
      $region49: #{feature_propagation_forward.1} parent=5 // pred_check
        _
      $region50: #{feature_propagation_forward.1} parent=5 // pred_check_branch
        %324 = sbr.rel (%p321) target = $region52
      $region51: #{feature_propagation_forward.1} parent=5 // pred_region
        %s325 = ssub.s32 %s17, 1
        %s326 = smul.u32 8, %s27
        %p327 = scmp.lt.s32.totalorder %s26, 1
        %s328 = scalar_select %p327, %s26, 1
        %p329 = scmp.lt.s32.totalorder %s326, 7
        %s330 = scalar_select %p329, %s326, 7
        %s331 = smul.addr %s328, 8
        %s332 = sadd.s32 %s330, %s331
        %s333 = smul.addr %s332, 8
        %s334 = scalar_lea.vmem %s0, %s333
        %p335 = pneg %p57
        %p336 = pneg %p54
        %p337 = scmp.lt.s32.totalorder %s26, 1
        %s338 = scalar_select %p337, %s26, 1
        %s339 = smul.addr %s338, 4
        %s340 = scalar_lea.vmem %s1, %s339
        %p341 = pneg %p83
        %p342 = pneg %p80
        %p343 = scmp.lt.s32.totalorder %s26, 1
        %s344 = scalar_select %p343, %s26, 1
        %s345 = smul.addr %s344, 2
        %s346 = smul.addr %s345, 8
        %s347 = scalar_lea.vmem %s2, %s346
        %p348 = pneg %p109
        %p349 = pneg %p106
        %p350 = scmp.lt.s32.totalorder %s26, 1
        %s351 = scalar_select %p350, %s26, 1
        %p352 = scmp.lt.s32.totalorder %s27, 0
        %s353 = scalar_select %p352, %s27, 0
        %s354 = smul.addr %s351, 2
        %s355 = sadd.s32 %s353, %s354
        %s356 = smul.addr %s355, 8
        %s357 = scalar_lea.vmem %s3, %s356
        %p358 = pneg %p137
        %p359 = pneg %p134
        %p360 = pneg %p158
        %p361 = pneg %p155
        %p362 = pneg %p179
        %p363 = pneg %p176
        %p364 = pneg %p200
        %p365 = pneg %p197
        %p366 = pneg %p221
        %p367 = pneg %p218
        %p368 = pneg %p249
        %p369 = pneg %p246
        %s370 = sand.u32 %s236, 1
        %s371 = scalar_lea.sflag [#allocation3], %s370
        %s372 = sand.u32 %s236, 1
        %s373 = smul.addr %s372, 32
        %s374 = scalar_lea.vmem [#allocation2], %s373
        %s375 = smul.u32 8, %s27
        %p376 = scmp.lt.s32.totalorder %s26, 1
        %s377 = scalar_select %p376, %s26, 1
        %p378 = scmp.lt.s32.totalorder %s375, 7
        %s379 = scalar_select %p378, %s375, 7
        %s380 = smul.addr %s377, 8
        %s381 = sadd.s32 %s379, %s380
        %s382 = smul.addr %s381, 8
        %s383 = scalar_lea.vmem %s0, %s382
        %s384 = smul.u32 8, %s27
        %p385 = scmp.lt.s32.totalorder %s26, 1
        %s386 = scalar_select %p385, %s26, 1
        %s387 = smul.addr %s386, 4
        %s388 = scalar_lea.vmem %s1, %s387
        %p389 = scmp.lt.s32.totalorder %s26, 1
        %s390 = scalar_select %p389, %s26, 1
        %s391 = smul.addr %s390, 2
        %s392 = smul.addr %s391, 8
        %s393 = scalar_lea.vmem %s2, %s392
        %p394 = scmp.lt.s32.totalorder %s26, 1
        %s395 = scalar_select %p394, %s26, 1
        %p396 = scmp.lt.s32.totalorder %s27, 0
        %s397 = scalar_select %p396, %s27, 0
        %s398 = smul.addr %s395, 2
        %s399 = sadd.s32 %s397, %s398
        %s400 = smul.addr %s399, 8
        %s401 = scalar_lea.vmem %s3, %s400
        %v403 = vld [vmem:[%s383] sm:$0xff]
        %v404 = vld [vmem:[%s383 + $0x8] sm:$0xff]
        %v405 = vld [vmem:[%s383 + $0x10] sm:$0xff]
        %v406 = vld [vmem:[%s383 + $0x18] sm:$0xff]
        %v407 = vld [vmem:[%s383 + $0x20] sm:$0xff]
        %v408 = vld [vmem:[%s383 + $0x28] sm:$0xff]
        %v409 = vld [vmem:[%s383 + $0x30] sm:$0xff]
        %v410 = vld [vmem:[%s383 + $0x38] sm:$0xff]
        %v411 = vld [vmem:[%s388] sm:$0x7]
        %413 = vset.pattern.permute.xlu0 0
        %414 = vperm.xlu0 %413, %v403
        %v415 = vpop.permute.xlu0 %414
        %418 = vset.pattern.permute.xlu0 0
        %419 = vperm.xlu0 %418, %v404
        %v420 = vpop.permute.xlu0 %419
        %423 = vset.pattern.permute.xlu0 0
        %424 = vperm.xlu0 %423, %v405
        %v425 = vpop.permute.xlu0 %424
        %428 = vset.pattern.permute.xlu0 0
        %429 = vperm.xlu0 %428, %v406
        %v430 = vpop.permute.xlu0 %429
        %433 = vset.pattern.permute.xlu0 0
        %434 = vperm.xlu0 %433, %v407
        %v435 = vpop.permute.xlu0 %434
        %438 = vset.pattern.permute.xlu0 0
        %439 = vperm.xlu0 %438, %v408
        %v440 = vpop.permute.xlu0 %439
        %443 = vset.pattern.permute.xlu0 0
        %444 = vperm.xlu0 %443, %v409
        %v445 = vpop.permute.xlu0 %444
        %448 = vset.pattern.permute.xlu0 0
        %449 = vperm.xlu0 %448, %v410
        %v450 = vpop.permute.xlu0 %449
        %v452 = vlaneseq
        %v453 = vshrl.u32 %v452, 7
        %v454 = vsub.s32 0, %v453
        %v455 = vrot.slane %v411, %v454
        %v456 = vsub.f32 %v415, %v455
        %v457 = vsub.f32 %v420, %v455
        %v458 = vsub.f32 %v425, %v455
        %v459 = vsub.f32 %v430, %v455
        %v460 = vsub.f32 %v435, %v455
        %v461 = vsub.f32 %v440, %v455
        %v462 = vsub.f32 %v445, %v455
        %v463 = vsub.f32 %v450, %v455
        %v464 = vmul.f32 %v456, %v456
        %v465 = vmul.f32 %v457, %v457
        %v466 = vmul.f32 %v458, %v458
        %v467 = vmul.f32 %v459, %v459
        %v468 = vmul.f32 %v460, %v460
        %v469 = vmul.f32 %v461, %v461
        %v470 = vmul.f32 %v462, %v462
        %v471 = vmul.f32 %v463, %v463
        %v472 = vadd.f32 %v464, 0.0
        %v473 = vadd.f32 %v465, 0.0
        %v474 = vadd.f32 %v466, 0.0
        %v475 = vadd.f32 %v467, 0.0
        %v476 = vadd.f32 %v468, 0.0
        %v477 = vadd.f32 %v469, 0.0
        %v478 = vadd.f32 %v470, 0.0
        %v479 = vadd.f32 %v471, 0.0
        %480 = vset.pattern.permute.xlu0 1
        %481 = vperm.xlu0 %480, %v403
        %v482 = vpop.permute.xlu0 %481
        %484 = vset.pattern.permute.xlu0 1
        %485 = vperm.xlu0 %484, %v404
        %v486 = vpop.permute.xlu0 %485
        %488 = vset.pattern.permute.xlu0 1
        %489 = vperm.xlu0 %488, %v405
        %v490 = vpop.permute.xlu0 %489
        %492 = vset.pattern.permute.xlu0 1
        %493 = vperm.xlu0 %492, %v406
        %v494 = vpop.permute.xlu0 %493
        %496 = vset.pattern.permute.xlu0 1
        %497 = vperm.xlu0 %496, %v407
        %v498 = vpop.permute.xlu0 %497
        %500 = vset.pattern.permute.xlu0 1
        %501 = vperm.xlu0 %500, %v408
        %v502 = vpop.permute.xlu0 %501
        %504 = vset.pattern.permute.xlu0 1
        %505 = vperm.xlu0 %504, %v409
        %v506 = vpop.permute.xlu0 %505
        %508 = vset.pattern.permute.xlu0 1
        %509 = vperm.xlu0 %508, %v410
        %v510 = vpop.permute.xlu0 %509
        %v512 = vlaneseq
        %v513 = vshrl.u32 %v512, 7
        %v514 = vsub.s32 1, %v513
        %v515 = vrot.slane %v411, %v514
        %v516 = vsub.f32 %v482, %v515
        %v517 = vsub.f32 %v486, %v515
        %v518 = vsub.f32 %v490, %v515
        %v519 = vsub.f32 %v494, %v515
        %v520 = vsub.f32 %v498, %v515
        %v521 = vsub.f32 %v502, %v515
        %v522 = vsub.f32 %v506, %v515
        %v523 = vsub.f32 %v510, %v515
        %v524 = vmul.f32 %v516, %v516
        %v525 = vmul.f32 %v517, %v517
        %v526 = vmul.f32 %v518, %v518
        %v527 = vmul.f32 %v519, %v519
        %v528 = vmul.f32 %v520, %v520
        %v529 = vmul.f32 %v521, %v521
        %v530 = vmul.f32 %v522, %v522
        %v531 = vmul.f32 %v523, %v523
        %v532 = vadd.f32 %v472, %v524
        %v533 = vadd.f32 %v473, %v525
        %v534 = vadd.f32 %v474, %v526
        %v535 = vadd.f32 %v475, %v527
        %v536 = vadd.f32 %v476, %v528
        %v537 = vadd.f32 %v477, %v529
        %v538 = vadd.f32 %v478, %v530
        %v539 = vadd.f32 %v479, %v531
        %540 = vset.pattern.permute.xlu0 2
        %541 = vperm.xlu0 %540, %v403
        %v542 = vpop.permute.xlu0 %541
        %544 = vset.pattern.permute.xlu0 2
        %545 = vperm.xlu0 %544, %v404
        %v546 = vpop.permute.xlu0 %545
        %548 = vset.pattern.permute.xlu0 2
        %549 = vperm.xlu0 %548, %v405
        %v550 = vpop.permute.xlu0 %549
        %552 = vset.pattern.permute.xlu0 2
        %553 = vperm.xlu0 %552, %v406
        %v554 = vpop.permute.xlu0 %553
        %556 = vset.pattern.permute.xlu0 2
        %557 = vperm.xlu0 %556, %v407
        %v558 = vpop.permute.xlu0 %557
        %560 = vset.pattern.permute.xlu0 2
        %561 = vperm.xlu0 %560, %v408
        %v562 = vpop.permute.xlu0 %561
        %564 = vset.pattern.permute.xlu0 2
        %565 = vperm.xlu0 %564, %v409
        %v566 = vpop.permute.xlu0 %565
        %568 = vset.pattern.permute.xlu0 2
        %569 = vperm.xlu0 %568, %v410
        %v570 = vpop.permute.xlu0 %569
        %v572 = vlaneseq
        %v573 = vshrl.u32 %v572, 7
        %v574 = vsub.s32 2, %v573
        %v575 = vrot.slane %v411, %v574
        %v576 = vsub.f32 %v542, %v575
        %v577 = vsub.f32 %v546, %v575
        %v578 = vsub.f32 %v550, %v575
        %v579 = vsub.f32 %v554, %v575
        %v580 = vsub.f32 %v558, %v575
        %v581 = vsub.f32 %v562, %v575
        %v582 = vsub.f32 %v566, %v575
        %v583 = vsub.f32 %v570, %v575
        %v584 = vmul.f32 %v576, %v576
        %v585 = vmul.f32 %v577, %v577
        %v586 = vmul.f32 %v578, %v578
        %v587 = vmul.f32 %v579, %v579
        %v588 = vmul.f32 %v580, %v580
        %v589 = vmul.f32 %v581, %v581
        %v590 = vmul.f32 %v582, %v582
        %v591 = vmul.f32 %v583, %v583
        %v592 = vadd.f32 %v532, %v584
        %v593 = vadd.f32 %v533, %v585
        %v594 = vadd.f32 %v534, %v586
        %v595 = vadd.f32 %v535, %v587
        %v596 = vadd.f32 %v536, %v588
        %v597 = vadd.f32 %v537, %v589
        %v598 = vadd.f32 %v538, %v590
        %v599 = vadd.f32 %v539, %v591
        %v600 = vlaneseq
        %v601 = vand.u32 %v600, 127
        %vm602 = vcmask 130048
        %v603 = vsel %vm602, %v592, inf
        %604 = vmin.xlane.f32.xlu0 %v603
        %v605 = vpop.xlane.xlu0 %604
        %v606 = vsel %vm602, %v593, inf
        %607 = vmin.xlane.f32.xlu0 %v606
        %v608 = vpop.xlane.xlu0 %607
        %v609 = vsel %vm602, %v594, inf
        %610 = vmin.xlane.f32.xlu0 %v609
        %v611 = vpop.xlane.xlu0 %610
        %v612 = vsel %vm602, %v595, inf
        %613 = vmin.xlane.f32.xlu0 %v612
        %v614 = vpop.xlane.xlu0 %613
        %v615 = vsel %vm602, %v596, inf
        %616 = vmin.xlane.f32.xlu0 %v615
        %v617 = vpop.xlane.xlu0 %616
        %v618 = vsel %vm602, %v597, inf
        %619 = vmin.xlane.f32.xlu0 %v618
        %v620 = vpop.xlane.xlu0 %619
        %v621 = vsel %vm602, %v598, inf
        %622 = vmin.xlane.f32.xlu0 %v621
        %v623 = vpop.xlane.xlu0 %622
        %v624 = vsel %vm602, %v599, inf
        %625 = vmin.xlane.f32.xlu0 %v624
        %v626 = vpop.xlane.xlu0 %625
        %vm627 = vcmp.le.f32.partialorder %v592, %v605
        %vm628 = vcmp.le.f32.partialorder %v593, %v608
        %vm629 = vcmp.le.f32.partialorder %v594, %v611
        %vm630 = vcmp.le.f32.partialorder %v595, %v614
        %vm631 = vcmp.le.f32.partialorder %v596, %v617
        %vm632 = vcmp.le.f32.partialorder %v597, %v620
        %vm633 = vcmp.le.f32.partialorder %v598, %v623
        %vm634 = vcmp.le.f32.partialorder %v599, %v626
        %v635 = vsel %vm627, %v601, 16
        %v636 = vsel %vm628, %v601, 16
        %v637 = vsel %vm629, %v601, 16
        %v638 = vsel %vm630, %v601, 16
        %v639 = vsel %vm631, %v601, 16
        %v640 = vsel %vm632, %v601, 16
        %v641 = vsel %vm633, %v601, 16
        %v642 = vsel %vm634, %v601, 16
        %v643 = vsel %vm602, %v635, 2147483647
        %v644 = vand.u32 %v643, 65535
        %v645 = vshra.s32 %v643, 16
        %v646 = vcvt.s32.f32 %v644
        %v647 = vcvt.s32.f32 %v645
        %648 = vmin.xlane.f32.xlu0 %v647
        %v649 = vpop.xlane.xlu0 %648
        %vm650 = vcmp.eq.f32.partialorder %v647, %v649
        %v651 = vsel %vm650, %v646, inf
        %652 = vmin.xlane.f32.xlu0 %v651
        %v653 = vpop.xlane.xlu0 %652
        %v654 = vcvt.f32.s32 %v653
        %v655 = vcvt.f32.s32 %v649
        %v656 = vshll.u32 %v655, 16
        %v657 = vadd.s32 %v656, %v654
        %v658 = vsel %vm602, %v636, 2147483647
        %v659 = vand.u32 %v658, 65535
        %v660 = vshra.s32 %v658, 16
        %v661 = vcvt.s32.f32 %v659
        %v662 = vcvt.s32.f32 %v660
        %663 = vmin.xlane.f32.xlu0 %v662
        %v664 = vpop.xlane.xlu0 %663
        %vm665 = vcmp.eq.f32.partialorder %v662, %v664
        %v666 = vsel %vm665, %v661, inf
        %667 = vmin.xlane.f32.xlu0 %v666
        %v668 = vpop.xlane.xlu0 %667
        %v669 = vcvt.f32.s32 %v668
        %v670 = vcvt.f32.s32 %v664
        %v671 = vshll.u32 %v670, 16
        %v672 = vadd.s32 %v671, %v669
        %v673 = vsel %vm602, %v637, 2147483647
        %v674 = vand.u32 %v673, 65535
        %v675 = vshra.s32 %v673, 16
        %v676 = vcvt.s32.f32 %v674
        %v677 = vcvt.s32.f32 %v675
        %678 = vmin.xlane.f32.xlu0 %v677
        %v679 = vpop.xlane.xlu0 %678
        %vm680 = vcmp.eq.f32.partialorder %v677, %v679
        %v681 = vsel %vm680, %v676, inf
        %682 = vmin.xlane.f32.xlu0 %v681
        %v683 = vpop.xlane.xlu0 %682
        %v684 = vcvt.f32.s32 %v683
        %v685 = vcvt.f32.s32 %v679
        %v686 = vshll.u32 %v685, 16
        %v687 = vadd.s32 %v686, %v684
        %v688 = vsel %vm602, %v638, 2147483647
        %v689 = vand.u32 %v688, 65535
        %v690 = vshra.s32 %v688, 16
        %v691 = vcvt.s32.f32 %v689
        %v692 = vcvt.s32.f32 %v690
        %693 = vmin.xlane.f32.xlu0 %v692
        %v694 = vpop.xlane.xlu0 %693
        %vm695 = vcmp.eq.f32.partialorder %v692, %v694
        %v696 = vsel %vm695, %v691, inf
        %697 = vmin.xlane.f32.xlu0 %v696
        %v698 = vpop.xlane.xlu0 %697
        %v699 = vcvt.f32.s32 %v698
        %v700 = vcvt.f32.s32 %v694
        %v701 = vshll.u32 %v700, 16
        %v702 = vadd.s32 %v701, %v699
        %v703 = vsel %vm602, %v639, 2147483647
        %v704 = vand.u32 %v703, 65535
        %v705 = vshra.s32 %v703, 16
        %v706 = vcvt.s32.f32 %v704
        %v707 = vcvt.s32.f32 %v705
        %708 = vmin.xlane.f32.xlu0 %v707
        %v709 = vpop.xlane.xlu0 %708
        %vm710 = vcmp.eq.f32.partialorder %v707, %v709
        %v711 = vsel %vm710, %v706, inf
        %712 = vmin.xlane.f32.xlu0 %v711
        %v713 = vpop.xlane.xlu0 %712
        %v714 = vcvt.f32.s32 %v713
        %v715 = vcvt.f32.s32 %v709
        %v716 = vshll.u32 %v715, 16
        %v717 = vadd.s32 %v716, %v714
        %v718 = vsel %vm602, %v640, 2147483647
        %v719 = vand.u32 %v718, 65535
        %v720 = vshra.s32 %v718, 16
        %v721 = vcvt.s32.f32 %v719
        %v722 = vcvt.s32.f32 %v720
        %723 = vmin.xlane.f32.xlu0 %v722
        %v724 = vpop.xlane.xlu0 %723
        %vm725 = vcmp.eq.f32.partialorder %v722, %v724
        %v726 = vsel %vm725, %v721, inf
        %727 = vmin.xlane.f32.xlu0 %v726
        %v728 = vpop.xlane.xlu0 %727
        %v729 = vcvt.f32.s32 %v728
        %v730 = vcvt.f32.s32 %v724
        %v731 = vshll.u32 %v730, 16
        %v732 = vadd.s32 %v731, %v729
        %v733 = vsel %vm602, %v641, 2147483647
        %v734 = vand.u32 %v733, 65535
        %v735 = vshra.s32 %v733, 16
        %v736 = vcvt.s32.f32 %v734
        %v737 = vcvt.s32.f32 %v735
        %738 = vmin.xlane.f32.xlu0 %v737
        %v739 = vpop.xlane.xlu0 %738
        %vm740 = vcmp.eq.f32.partialorder %v737, %v739
        %v741 = vsel %vm740, %v736, inf
        %742 = vmin.xlane.f32.xlu0 %v741
        %v743 = vpop.xlane.xlu0 %742
        %v744 = vcvt.f32.s32 %v743
        %v745 = vcvt.f32.s32 %v739
        %v746 = vshll.u32 %v745, 16
        %v747 = vadd.s32 %v746, %v744
        %v748 = vsel %vm602, %v642, 2147483647
        %v749 = vand.u32 %v748, 65535
        %v750 = vshra.s32 %v748, 16
        %v751 = vcvt.s32.f32 %v749
        %v752 = vcvt.s32.f32 %v750
        %753 = vmin.xlane.f32.xlu0 %v752
        %v754 = vpop.xlane.xlu0 %753
        %vm755 = vcmp.eq.f32.partialorder %v752, %v754
        %v756 = vsel %vm755, %v751, inf
        %757 = vmin.xlane.f32.xlu0 %v756
        %v758 = vpop.xlane.xlu0 %757
        %v759 = vcvt.f32.s32 %v758
        %v760 = vcvt.f32.s32 %v754
        %v761 = vshll.u32 %v760, 16
        %v762 = vadd.s32 %v761, %v759
        %vm763 = vcmp.eq.s32.totalorder %v601, %v657
        %vm764 = vcmp.eq.s32.totalorder %v601, %v672
        %vm765 = vcmp.eq.s32.totalorder %v601, %v687
        %vm766 = vcmp.eq.s32.totalorder %v601, %v702
        %vm767 = vcmp.eq.s32.totalorder %v601, %v717
        %vm768 = vcmp.eq.s32.totalorder %v601, %v732
        %vm769 = vcmp.eq.s32.totalorder %v601, %v747
        %vm770 = vcmp.eq.s32.totalorder %v601, %v762
        %v771 = vadd.f32 %v605, 1e-08
        %v772 = vadd.f32 %v608, 1e-08
        %v773 = vadd.f32 %v611, 1e-08
        %v774 = vadd.f32 %v614, 1e-08
        %v775 = vadd.f32 %v617, 1e-08
        %v776 = vadd.f32 %v620, 1e-08
        %v777 = vadd.f32 %v623, 1e-08
        %v778 = vadd.f32 %v626, 1e-08
        %v779 = vrcp.pop %v771
        %v780 = vmul.f32 1.0, %v779
        %v781 = vrcp.pop %v772
        %v782 = vmul.f32 1.0, %v781
        %v783 = vrcp.pop %v773
        %v784 = vmul.f32 1.0, %v783
        %v785 = vrcp.pop %v774
        %v786 = vmul.f32 1.0, %v785
        %v787 = vrcp.pop %v775
        %v788 = vmul.f32 1.0, %v787
        %v789 = vrcp.pop %v776
        %v790 = vmul.f32 1.0, %v789
        %v791 = vrcp.pop %v777
        %v792 = vmul.f32 1.0, %v791
        %v793 = vrcp.pop %v778
        %v794 = vmul.f32 1.0, %v793
        %v795 = vsel %vm763, %v780, 0.0
        %v796 = vsel %vm764, %v782, 0.0
        %v797 = vsel %vm765, %v784, 0.0
        %v798 = vsel %vm766, %v786, 0.0
        %v799 = vsel %vm767, %v788, 0.0
        %v800 = vsel %vm768, %v790, 0.0
        %v801 = vsel %vm769, %v792, 0.0
        %v802 = vsel %vm770, %v794, 0.0
        %v803 = vadd.f32 %v795, 0.0
        %v804 = vadd.f32 %v796, 0.0
        %v805 = vadd.f32 %v797, 0.0
        %v806 = vadd.f32 %v798, 0.0
        %v807 = vadd.f32 %v799, 0.0
        %v808 = vadd.f32 %v800, 0.0
        %v809 = vadd.f32 %v801, 0.0
        %v810 = vadd.f32 %v802, 0.0
        %v811 = vadd.f32 %v780, 0.0
        %v812 = vadd.f32 %v782, 0.0
        %v813 = vadd.f32 %v784, 0.0
        %v814 = vadd.f32 %v786, 0.0
        %v815 = vadd.f32 %v788, 0.0
        %v816 = vadd.f32 %v790, 0.0
        %v817 = vadd.f32 %v792, 0.0
        %v818 = vadd.f32 %v794, 0.0
        %v819 = vsel %vm763, inf, %v592
        %v820 = vsel %vm764, inf, %v593
        %v821 = vsel %vm765, inf, %v594
        %v822 = vsel %vm766, inf, %v595
        %v823 = vsel %vm767, inf, %v596
        %v824 = vsel %vm768, inf, %v597
        %v825 = vsel %vm769, inf, %v598
        %v826 = vsel %vm770, inf, %v599
        %v827 = vsel %vm602, %v819, inf
        %828 = vmin.xlane.f32.xlu0 %v827
        %v829 = vpop.xlane.xlu0 %828
        %v830 = vsel %vm602, %v820, inf
        %831 = vmin.xlane.f32.xlu0 %v830
        %v832 = vpop.xlane.xlu0 %831
        %v833 = vsel %vm602, %v821, inf
        %834 = vmin.xlane.f32.xlu0 %v833
        %v835 = vpop.xlane.xlu0 %834
        %v836 = vsel %vm602, %v822, inf
        %837 = vmin.xlane.f32.xlu0 %v836
        %v838 = vpop.xlane.xlu0 %837
        %v839 = vsel %vm602, %v823, inf
        %840 = vmin.xlane.f32.xlu0 %v839
        %v841 = vpop.xlane.xlu0 %840
        %v842 = vsel %vm602, %v824, inf
        %843 = vmin.xlane.f32.xlu0 %v842
        %v844 = vpop.xlane.xlu0 %843
        %v845 = vsel %vm602, %v825, inf
        %846 = vmin.xlane.f32.xlu0 %v845
        %v847 = vpop.xlane.xlu0 %846
        %v848 = vsel %vm602, %v826, inf
        %849 = vmin.xlane.f32.xlu0 %v848
        %v850 = vpop.xlane.xlu0 %849
        %vm851 = vcmp.le.f32.partialorder %v819, %v829
        %vm852 = vcmp.le.f32.partialorder %v820, %v832
        %vm853 = vcmp.le.f32.partialorder %v821, %v835
        %vm854 = vcmp.le.f32.partialorder %v822, %v838
        %vm855 = vcmp.le.f32.partialorder %v823, %v841
        %vm856 = vcmp.le.f32.partialorder %v824, %v844
        %vm857 = vcmp.le.f32.partialorder %v825, %v847
        %vm858 = vcmp.le.f32.partialorder %v826, %v850
        %v859 = vsel %vm851, %v601, 16
        %v860 = vsel %vm852, %v601, 16
        %v861 = vsel %vm853, %v601, 16
        %v862 = vsel %vm854, %v601, 16
        %v863 = vsel %vm855, %v601, 16
        %v864 = vsel %vm856, %v601, 16
        %v865 = vsel %vm857, %v601, 16
        %v866 = vsel %vm858, %v601, 16
        %v867 = vsel %vm602, %v859, 2147483647
        %v868 = vand.u32 %v867, 65535
        %v869 = vshra.s32 %v867, 16
        %v870 = vcvt.s32.f32 %v868
        %v871 = vcvt.s32.f32 %v869
        %872 = vmin.xlane.f32.xlu0 %v871
        %v873 = vpop.xlane.xlu0 %872
        %vm874 = vcmp.eq.f32.partialorder %v871, %v873
        %v875 = vsel %vm874, %v870, inf
        %876 = vmin.xlane.f32.xlu0 %v875
        %v877 = vpop.xlane.xlu0 %876
        %v878 = vcvt.f32.s32 %v877
        %v879 = vcvt.f32.s32 %v873
        %v880 = vshll.u32 %v879, 16
        %v881 = vadd.s32 %v880, %v878
        %v882 = vsel %vm602, %v860, 2147483647
        %v883 = vand.u32 %v882, 65535
        %v884 = vshra.s32 %v882, 16
        %v885 = vcvt.s32.f32 %v883
        %v886 = vcvt.s32.f32 %v884
        %887 = vmin.xlane.f32.xlu0 %v886
        %v888 = vpop.xlane.xlu0 %887
        %vm889 = vcmp.eq.f32.partialorder %v886, %v888
        %v890 = vsel %vm889, %v885, inf
        %891 = vmin.xlane.f32.xlu0 %v890
        %v892 = vpop.xlane.xlu0 %891
        %v893 = vcvt.f32.s32 %v892
        %v894 = vcvt.f32.s32 %v888
        %v895 = vshll.u32 %v894, 16
        %v896 = vadd.s32 %v895, %v893
        %v897 = vsel %vm602, %v861, 2147483647
        %v898 = vand.u32 %v897, 65535
        %v899 = vshra.s32 %v897, 16
        %v900 = vcvt.s32.f32 %v898
        %v901 = vcvt.s32.f32 %v899
        %902 = vmin.xlane.f32.xlu0 %v901
        %v903 = vpop.xlane.xlu0 %902
        %vm904 = vcmp.eq.f32.partialorder %v901, %v903
        %v905 = vsel %vm904, %v900, inf
        %906 = vmin.xlane.f32.xlu0 %v905
        %v907 = vpop.xlane.xlu0 %906
        %v908 = vcvt.f32.s32 %v907
        %v909 = vcvt.f32.s32 %v903
        %v910 = vshll.u32 %v909, 16
        %v911 = vadd.s32 %v910, %v908
        %v912 = vsel %vm602, %v862, 2147483647
        %v913 = vand.u32 %v912, 65535
        %v914 = vshra.s32 %v912, 16
        %v915 = vcvt.s32.f32 %v913
        %v916 = vcvt.s32.f32 %v914
        %917 = vmin.xlane.f32.xlu0 %v916
        %v918 = vpop.xlane.xlu0 %917
        %vm919 = vcmp.eq.f32.partialorder %v916, %v918
        %v920 = vsel %vm919, %v915, inf
        %921 = vmin.xlane.f32.xlu0 %v920
        %v922 = vpop.xlane.xlu0 %921
        %v923 = vcvt.f32.s32 %v922
        %v924 = vcvt.f32.s32 %v918
        %v925 = vshll.u32 %v924, 16
        %v926 = vadd.s32 %v925, %v923
        %v927 = vsel %vm602, %v863, 2147483647
        %v928 = vand.u32 %v927, 65535
        %v929 = vshra.s32 %v927, 16
        %v930 = vcvt.s32.f32 %v928
        %v931 = vcvt.s32.f32 %v929
        %932 = vmin.xlane.f32.xlu0 %v931
        %v933 = vpop.xlane.xlu0 %932
        %vm934 = vcmp.eq.f32.partialorder %v931, %v933
        %v935 = vsel %vm934, %v930, inf
        %936 = vmin.xlane.f32.xlu0 %v935
        %v937 = vpop.xlane.xlu0 %936
        %v938 = vcvt.f32.s32 %v937
        %v939 = vcvt.f32.s32 %v933
        %v940 = vshll.u32 %v939, 16
        %v941 = vadd.s32 %v940, %v938
        %v942 = vsel %vm602, %v864, 2147483647
        %v943 = vand.u32 %v942, 65535
        %v944 = vshra.s32 %v942, 16
        %v945 = vcvt.s32.f32 %v943
        %v946 = vcvt.s32.f32 %v944
        %947 = vmin.xlane.f32.xlu0 %v946
        %v948 = vpop.xlane.xlu0 %947
        %vm949 = vcmp.eq.f32.partialorder %v946, %v948
        %v950 = vsel %vm949, %v945, inf
        %951 = vmin.xlane.f32.xlu0 %v950
        %v952 = vpop.xlane.xlu0 %951
        %v953 = vcvt.f32.s32 %v952
        %v954 = vcvt.f32.s32 %v948
        %v955 = vshll.u32 %v954, 16
        %v956 = vadd.s32 %v955, %v953
        %v957 = vsel %vm602, %v865, 2147483647
        %v958 = vand.u32 %v957, 65535
        %v959 = vshra.s32 %v957, 16
        %v960 = vcvt.s32.f32 %v958
        %v961 = vcvt.s32.f32 %v959
        %962 = vmin.xlane.f32.xlu0 %v961
        %v963 = vpop.xlane.xlu0 %962
        %vm964 = vcmp.eq.f32.partialorder %v961, %v963
        %v965 = vsel %vm964, %v960, inf
        %966 = vmin.xlane.f32.xlu0 %v965
        %v967 = vpop.xlane.xlu0 %966
        %v968 = vcvt.f32.s32 %v967
        %v969 = vcvt.f32.s32 %v963
        %v970 = vshll.u32 %v969, 16
        %v971 = vadd.s32 %v970, %v968
        %v972 = vsel %vm602, %v866, 2147483647
        %v973 = vand.u32 %v972, 65535
        %v974 = vshra.s32 %v972, 16
        %v975 = vcvt.s32.f32 %v973
        %v976 = vcvt.s32.f32 %v974
        %977 = vmin.xlane.f32.xlu0 %v976
        %v978 = vpop.xlane.xlu0 %977
        %vm979 = vcmp.eq.f32.partialorder %v976, %v978
        %v980 = vsel %vm979, %v975, inf
        %981 = vmin.xlane.f32.xlu0 %v980
        %v982 = vpop.xlane.xlu0 %981
        %v983 = vcvt.f32.s32 %v982
        %v984 = vcvt.f32.s32 %v978
        %v985 = vshll.u32 %v984, 16
        %v986 = vadd.s32 %v985, %v983
        %vm987 = vcmp.eq.s32.totalorder %v601, %v881
        %vm988 = vcmp.eq.s32.totalorder %v601, %v896
        %vm989 = vcmp.eq.s32.totalorder %v601, %v911
        %vm990 = vcmp.eq.s32.totalorder %v601, %v926
        %vm991 = vcmp.eq.s32.totalorder %v601, %v941
        %vm992 = vcmp.eq.s32.totalorder %v601, %v956
        %vm993 = vcmp.eq.s32.totalorder %v601, %v971
        %vm994 = vcmp.eq.s32.totalorder %v601, %v986
        %v995 = vadd.f32 %v829, 1e-08
        %v996 = vadd.f32 %v832, 1e-08
        %v997 = vadd.f32 %v835, 1e-08
        %v998 = vadd.f32 %v838, 1e-08
        %v999 = vadd.f32 %v841, 1e-08
        %v1000 = vadd.f32 %v844, 1e-08
        %v1001 = vadd.f32 %v847, 1e-08
        %v1002 = vadd.f32 %v850, 1e-08
        %v1003 = vrcp.pop %v995
        %v1004 = vmul.f32 1.0, %v1003
        %v1005 = vrcp.pop %v996
        %v1006 = vmul.f32 1.0, %v1005
        %v1007 = vrcp.pop %v997
        %v1008 = vmul.f32 1.0, %v1007
        %v1009 = vrcp.pop %v998
        %v1010 = vmul.f32 1.0, %v1009
        %v1011 = vrcp.pop %v999
        %v1012 = vmul.f32 1.0, %v1011
        %v1013 = vrcp.pop %v1000
        %v1014 = vmul.f32 1.0, %v1013
        %v1015 = vrcp.pop %v1001
        %v1016 = vmul.f32 1.0, %v1015
        %v1017 = vrcp.pop %v1002
        %v1018 = vmul.f32 1.0, %v1017
        %v1019 = vsel %vm987, %v1004, 0.0
        %v1020 = vsel %vm988, %v1006, 0.0
        %v1021 = vsel %vm989, %v1008, 0.0
        %v1022 = vsel %vm990, %v1010, 0.0
        %v1023 = vsel %vm991, %v1012, 0.0
        %v1024 = vsel %vm992, %v1014, 0.0
        %v1025 = vsel %vm993, %v1016, 0.0
        %v1026 = vsel %vm994, %v1018, 0.0
        %v1027 = vadd.f32 %v803, %v1019
        %v1028 = vadd.f32 %v804, %v1020
        %v1029 = vadd.f32 %v805, %v1021
        %v1030 = vadd.f32 %v806, %v1022
        %v1031 = vadd.f32 %v807, %v1023
        %v1032 = vadd.f32 %v808, %v1024
        %v1033 = vadd.f32 %v809, %v1025
        %v1034 = vadd.f32 %v810, %v1026
        %v1035 = vadd.f32 %v811, %v1004
        %v1036 = vadd.f32 %v812, %v1006
        %v1037 = vadd.f32 %v813, %v1008
        %v1038 = vadd.f32 %v814, %v1010
        %v1039 = vadd.f32 %v815, %v1012
        %v1040 = vadd.f32 %v816, %v1014
        %v1041 = vadd.f32 %v817, %v1016
        %v1042 = vadd.f32 %v818, %v1018
        %v1043 = vsel %vm987, inf, %v819
        %v1044 = vsel %vm988, inf, %v820
        %v1045 = vsel %vm989, inf, %v821
        %v1046 = vsel %vm990, inf, %v822
        %v1047 = vsel %vm991, inf, %v823
        %v1048 = vsel %vm992, inf, %v824
        %v1049 = vsel %vm993, inf, %v825
        %v1050 = vsel %vm994, inf, %v826
        %v1051 = vsel %vm602, %v1043, inf
        %1052 = vmin.xlane.f32.xlu0 %v1051
        %v1053 = vpop.xlane.xlu0 %1052
        %v1054 = vsel %vm602, %v1044, inf
        %1055 = vmin.xlane.f32.xlu0 %v1054
        %v1056 = vpop.xlane.xlu0 %1055
        %v1057 = vsel %vm602, %v1045, inf
        %1058 = vmin.xlane.f32.xlu0 %v1057
        %v1059 = vpop.xlane.xlu0 %1058
        %v1060 = vsel %vm602, %v1046, inf
        %1061 = vmin.xlane.f32.xlu0 %v1060
        %v1062 = vpop.xlane.xlu0 %1061
        %v1063 = vsel %vm602, %v1047, inf
        %1064 = vmin.xlane.f32.xlu0 %v1063
        %v1065 = vpop.xlane.xlu0 %1064
        %v1066 = vsel %vm602, %v1048, inf
        %1067 = vmin.xlane.f32.xlu0 %v1066
        %v1068 = vpop.xlane.xlu0 %1067
        %v1069 = vsel %vm602, %v1049, inf
        %1070 = vmin.xlane.f32.xlu0 %v1069
        %v1071 = vpop.xlane.xlu0 %1070
        %v1072 = vsel %vm602, %v1050, inf
        %1073 = vmin.xlane.f32.xlu0 %v1072
        %v1074 = vpop.xlane.xlu0 %1073
        %vm1075 = vcmp.le.f32.partialorder %v1043, %v1053
        %vm1076 = vcmp.le.f32.partialorder %v1044, %v1056
        %vm1077 = vcmp.le.f32.partialorder %v1045, %v1059
        %vm1078 = vcmp.le.f32.partialorder %v1046, %v1062
        %vm1079 = vcmp.le.f32.partialorder %v1047, %v1065
        %vm1080 = vcmp.le.f32.partialorder %v1048, %v1068
        %vm1081 = vcmp.le.f32.partialorder %v1049, %v1071
        %vm1082 = vcmp.le.f32.partialorder %v1050, %v1074
        %v1083 = vsel %vm1075, %v601, 16
        %v1084 = vsel %vm1076, %v601, 16
        %v1085 = vsel %vm1077, %v601, 16
        %v1086 = vsel %vm1078, %v601, 16
        %v1087 = vsel %vm1079, %v601, 16
        %v1088 = vsel %vm1080, %v601, 16
        %v1089 = vsel %vm1081, %v601, 16
        %v1090 = vsel %vm1082, %v601, 16
        %v1091 = vsel %vm602, %v1083, 2147483647
        %v1092 = vand.u32 %v1091, 65535
        %v1093 = vshra.s32 %v1091, 16
        %v1094 = vcvt.s32.f32 %v1092
        %v1095 = vcvt.s32.f32 %v1093
        %1096 = vmin.xlane.f32.xlu0 %v1095
        %v1097 = vpop.xlane.xlu0 %1096
        %vm1098 = vcmp.eq.f32.partialorder %v1095, %v1097
        %v1099 = vsel %vm1098, %v1094, inf
        %1100 = vmin.xlane.f32.xlu0 %v1099
        %v1101 = vpop.xlane.xlu0 %1100
        %v1102 = vcvt.f32.s32 %v1101
        %v1103 = vcvt.f32.s32 %v1097
        %v1104 = vshll.u32 %v1103, 16
        %v1105 = vadd.s32 %v1104, %v1102
        %v1106 = vsel %vm602, %v1084, 2147483647
        %v1107 = vand.u32 %v1106, 65535
        %v1108 = vshra.s32 %v1106, 16
        %v1109 = vcvt.s32.f32 %v1107
        %v1110 = vcvt.s32.f32 %v1108
        %1111 = vmin.xlane.f32.xlu0 %v1110
        %v1112 = vpop.xlane.xlu0 %1111
        %vm1113 = vcmp.eq.f32.partialorder %v1110, %v1112
        %v1114 = vsel %vm1113, %v1109, inf
        %1115 = vmin.xlane.f32.xlu0 %v1114
        %v1116 = vpop.xlane.xlu0 %1115
        %v1117 = vcvt.f32.s32 %v1116
        %v1118 = vcvt.f32.s32 %v1112
        %v1119 = vshll.u32 %v1118, 16
        %v1120 = vadd.s32 %v1119, %v1117
        %v1121 = vsel %vm602, %v1085, 2147483647
        %v1122 = vand.u32 %v1121, 65535
        %v1123 = vshra.s32 %v1121, 16
        %v1124 = vcvt.s32.f32 %v1122
        %v1125 = vcvt.s32.f32 %v1123
        %1126 = vmin.xlane.f32.xlu0 %v1125
        %v1127 = vpop.xlane.xlu0 %1126
        %vm1128 = vcmp.eq.f32.partialorder %v1125, %v1127
        %v1129 = vsel %vm1128, %v1124, inf
        %1130 = vmin.xlane.f32.xlu0 %v1129
        %v1131 = vpop.xlane.xlu0 %1130
        %v1132 = vcvt.f32.s32 %v1131
        %v1133 = vcvt.f32.s32 %v1127
        %v1134 = vshll.u32 %v1133, 16
        %v1135 = vadd.s32 %v1134, %v1132
        %v1136 = vsel %vm602, %v1086, 2147483647
        %v1137 = vand.u32 %v1136, 65535
        %v1138 = vshra.s32 %v1136, 16
        %v1139 = vcvt.s32.f32 %v1137
        %v1140 = vcvt.s32.f32 %v1138
        %1141 = vmin.xlane.f32.xlu0 %v1140
        %v1142 = vpop.xlane.xlu0 %1141
        %vm1143 = vcmp.eq.f32.partialorder %v1140, %v1142
        %v1144 = vsel %vm1143, %v1139, inf
        %1145 = vmin.xlane.f32.xlu0 %v1144
        %v1146 = vpop.xlane.xlu0 %1145
        %v1147 = vcvt.f32.s32 %v1146
        %v1148 = vcvt.f32.s32 %v1142
        %v1149 = vshll.u32 %v1148, 16
        %v1150 = vadd.s32 %v1149, %v1147
        %v1151 = vsel %vm602, %v1087, 2147483647
        %v1152 = vand.u32 %v1151, 65535
        %v1153 = vshra.s32 %v1151, 16
        %v1154 = vcvt.s32.f32 %v1152
        %v1155 = vcvt.s32.f32 %v1153
        %1156 = vmin.xlane.f32.xlu0 %v1155
        %v1157 = vpop.xlane.xlu0 %1156
        %vm1158 = vcmp.eq.f32.partialorder %v1155, %v1157
        %v1159 = vsel %vm1158, %v1154, inf
        %1160 = vmin.xlane.f32.xlu0 %v1159
        %v1161 = vpop.xlane.xlu0 %1160
        %v1162 = vcvt.f32.s32 %v1161
        %v1163 = vcvt.f32.s32 %v1157
        %v1164 = vshll.u32 %v1163, 16
        %v1165 = vadd.s32 %v1164, %v1162
        %v1166 = vsel %vm602, %v1088, 2147483647
        %v1167 = vand.u32 %v1166, 65535
        %v1168 = vshra.s32 %v1166, 16
        %v1169 = vcvt.s32.f32 %v1167
        %v1170 = vcvt.s32.f32 %v1168
        %1171 = vmin.xlane.f32.xlu0 %v1170
        %v1172 = vpop.xlane.xlu0 %1171
        %vm1173 = vcmp.eq.f32.partialorder %v1170, %v1172
        %v1174 = vsel %vm1173, %v1169, inf
        %1175 = vmin.xlane.f32.xlu0 %v1174
        %v1176 = vpop.xlane.xlu0 %1175
        %v1177 = vcvt.f32.s32 %v1176
        %v1178 = vcvt.f32.s32 %v1172
        %v1179 = vshll.u32 %v1178, 16
        %v1180 = vadd.s32 %v1179, %v1177
        %v1181 = vsel %vm602, %v1089, 2147483647
        %v1182 = vand.u32 %v1181, 65535
        %v1183 = vshra.s32 %v1181, 16
        %v1184 = vcvt.s32.f32 %v1182
        %v1185 = vcvt.s32.f32 %v1183
        %1186 = vmin.xlane.f32.xlu0 %v1185
        %v1187 = vpop.xlane.xlu0 %1186
        %vm1188 = vcmp.eq.f32.partialorder %v1185, %v1187
        %v1189 = vsel %vm1188, %v1184, inf
        %1190 = vmin.xlane.f32.xlu0 %v1189
        %v1191 = vpop.xlane.xlu0 %1190
        %v1192 = vcvt.f32.s32 %v1191
        %v1193 = vcvt.f32.s32 %v1187
        %v1194 = vshll.u32 %v1193, 16
        %v1195 = vadd.s32 %v1194, %v1192
        %v1196 = vsel %vm602, %v1090, 2147483647
        %v1197 = vand.u32 %v1196, 65535
        %v1198 = vshra.s32 %v1196, 16
        %v1199 = vcvt.s32.f32 %v1197
        %v1200 = vcvt.s32.f32 %v1198
        %1201 = vmin.xlane.f32.xlu0 %v1200
        %v1202 = vpop.xlane.xlu0 %1201
        %vm1203 = vcmp.eq.f32.partialorder %v1200, %v1202
        %v1204 = vsel %vm1203, %v1199, inf
        %1205 = vmin.xlane.f32.xlu0 %v1204
        %v1206 = vpop.xlane.xlu0 %1205
        %v1207 = vcvt.f32.s32 %v1206
        %v1208 = vcvt.f32.s32 %v1202
        %v1209 = vshll.u32 %v1208, 16
        %v1210 = vadd.s32 %v1209, %v1207
        %vm1211 = vcmp.eq.s32.totalorder %v601, %v1105
        %vm1212 = vcmp.eq.s32.totalorder %v601, %v1120
        %vm1213 = vcmp.eq.s32.totalorder %v601, %v1135
        %vm1214 = vcmp.eq.s32.totalorder %v601, %v1150
        %vm1215 = vcmp.eq.s32.totalorder %v601, %v1165
        %vm1216 = vcmp.eq.s32.totalorder %v601, %v1180
        %vm1217 = vcmp.eq.s32.totalorder %v601, %v1195
        %vm1218 = vcmp.eq.s32.totalorder %v601, %v1210
        %v1219 = vadd.f32 %v1053, 1e-08
        %v1220 = vadd.f32 %v1056, 1e-08
        %v1221 = vadd.f32 %v1059, 1e-08
        %v1222 = vadd.f32 %v1062, 1e-08
        %v1223 = vadd.f32 %v1065, 1e-08
        %v1224 = vadd.f32 %v1068, 1e-08
        %v1225 = vadd.f32 %v1071, 1e-08
        %v1226 = vadd.f32 %v1074, 1e-08
        %v1227 = vrcp.pop %v1219
        %v1228 = vmul.f32 1.0, %v1227
        %v1229 = vrcp.pop %v1220
        %v1230 = vmul.f32 1.0, %v1229
        %v1231 = vrcp.pop %v1221
        %v1232 = vmul.f32 1.0, %v1231
        %v1233 = vrcp.pop %v1222
        %v1234 = vmul.f32 1.0, %v1233
        %v1235 = vrcp.pop %v1223
        %v1236 = vmul.f32 1.0, %v1235
        %v1237 = vrcp.pop %v1224
        %v1238 = vmul.f32 1.0, %v1237
        %v1239 = vrcp.pop %v1225
        %v1240 = vmul.f32 1.0, %v1239
        %v1241 = vrcp.pop %v1226
        %v1242 = vmul.f32 1.0, %v1241
        %v1243 = vsel %vm1211, %v1228, 0.0
        %v1244 = vsel %vm1212, %v1230, 0.0
        %v1245 = vsel %vm1213, %v1232, 0.0
        %v1246 = vsel %vm1214, %v1234, 0.0
        %v1247 = vsel %vm1215, %v1236, 0.0
        %v1248 = vsel %vm1216, %v1238, 0.0
        %v1249 = vsel %vm1217, %v1240, 0.0
        %v1250 = vsel %vm1218, %v1242, 0.0
        %v1251 = vadd.f32 %v1027, %v1243
        %v1252 = vadd.f32 %v1028, %v1244
        %v1253 = vadd.f32 %v1029, %v1245
        %v1254 = vadd.f32 %v1030, %v1246
        %v1255 = vadd.f32 %v1031, %v1247
        %v1256 = vadd.f32 %v1032, %v1248
        %v1257 = vadd.f32 %v1033, %v1249
        %v1258 = vadd.f32 %v1034, %v1250
        %v1259 = vadd.f32 %v1035, %v1228
        %v1260 = vadd.f32 %v1036, %v1230
        %v1261 = vadd.f32 %v1037, %v1232
        %v1262 = vadd.f32 %v1038, %v1234
        %v1263 = vadd.f32 %v1039, %v1236
        %v1264 = vadd.f32 %v1040, %v1238
        %v1265 = vadd.f32 %v1041, %v1240
        %v1266 = vadd.f32 %v1042, %v1242
        %v1267 = vld [vmem:[%s393] sm:$0xff]
        %v1268 = vld [vmem:[%s393 + $0x8] sm:$0xff]
        %v1270 = vsel %vm602, %v1251, 0
        %v1273 = vsel %vm602, %v1252, 0
        %v1276 = vsel %vm602, %v1253, 0
        %v1279 = vsel %vm602, %v1254, 0
        %v1282 = vsel %vm602, %v1255, 0
        %v1285 = vsel %vm602, %v1256, 0
        %v1288 = vsel %vm602, %v1257, 0
        %v1291 = vsel %vm602, %v1258, 0
        %1293 = vmatprep.subr.mxu0 0.0
        %1294 = vmatpush1.msra.mxu0 %v1267
        %1295 = vmatprep.subr.mxu0 0.0
        %1296 = vmatpush1.msra.mxu0 %v1268
        %1297 = vmatprep.subr.mxu0 0.0
        %1298 = vmatpush1.msra.mxu0 0.0
        %1299 = vmatprep.subr.mxu0 0.0
        %1300 = vmatpush1.msra.mxu0 0.0
        %1301 = vmatprep.subr.mxu0 0.0
        %1302 = vmatpush1.msra.mxu0 0.0
        %1303 = vmatprep.subr.mxu0 0.0
        %1304 = vmatpush1.msra.mxu0 0.0
        %1305 = vmatprep.subr.mxu0 0.0
        %1306 = vmatpush1.msra.mxu0 0.0
        %1307 = vmatprep.subr.mxu0 0.0
        %1308 = vmatpush1.msra.mxu0 0.0
        %1309 = vmatprep.subr.mxu0 0.0
        %1310 = vmatpush1.msra.mxu0 0.0
        %1311 = vmatprep.subr.mxu0 0.0
        %1312 = vmatpush1.msra.mxu0 0.0
        %1313 = vmatprep.subr.mxu0 0.0
        %1314 = vmatpush1.msra.mxu0 0.0
        %1315 = vmatprep.subr.mxu0 0.0
        %1316 = vmatpush1.msra.mxu0 0.0
        %1317 = vmatprep.subr.mxu0 0.0
        %1318 = vmatpush1.msra.mxu0 0.0
        %1319 = vmatprep.subr.mxu0 0.0
        %1320 = vmatpush1.msra.mxu0 0.0
        %1321 = vmatprep.subr.mxu0 0.0
        %1322 = vmatpush1.msra.mxu0 0.0
        %1323 = vmatprep.subr.mxu0 0.0
        %1324 = vmatpush1.msra.mxu0 0.0
        %1325 = vmatprep.subr.mxu0 0.0
        %1326 = vmatpush1.msra.mxu0 0.0
        %1327 = vmatprep.subr.mxu0 0.0
        %1328 = vmatpush1.msra.mxu0 0.0
        %1329 = vmatprep.subr.mxu0 0.0
        %1330 = vmatpush1.msra.mxu0 0.0
        %1331 = vmatprep.subr.mxu0 0.0
        %1332 = vmatpush1.msra.mxu0 0.0
        %1333 = vmatprep.subr.mxu0 0.0
        %1334 = vmatpush1.msra.mxu0 0.0
        %1335 = vmatprep.subr.mxu0 0.0
        %1336 = vmatpush1.msra.mxu0 0.0
        %1337 = vmatprep.subr.mxu0 0.0
        %1338 = vmatpush1.msra.mxu0 0.0
        %1339 = vmatprep.subr.mxu0 0.0
        %1340 = vmatpush1.msra.mxu0 0.0
        %1341 = vmatprep.subr.mxu0 0.0
        %1342 = vmatpush1.msra.mxu0 0.0
        %1343 = vmatprep.subr.mxu0 0.0
        %1344 = vmatpush1.msra.mxu0 0.0
        %1345 = vmatprep.subr.mxu0 0.0
        %1346 = vmatpush1.msra.mxu0 0.0
        %1347 = vmatprep.subr.mxu0 0.0
        %1348 = vmatpush1.msra.mxu0 0.0
        %1349 = vmatprep.subr.mxu0 0.0
        %1350 = vmatpush1.msra.mxu0 0.0
        %1351 = vmatprep.subr.mxu0 0.0
        %1352 = vmatpush1.msra.mxu0 0.0
        %1353 = vmatprep.subr.mxu0 0.0
        %1354 = vmatpush1.msra.mxu0 0.0
        %1355 = vmatprep.subr.mxu0 0.0
        %1356 = vmatpush1.msra.mxu0 0.0
        %1357 = vmatprep.mubr.f32.mxu0 0.0
        %1358 = vmatmul.mubr.f32.gmra.mrb[0].mxu0 %v1270
        %v1359 = vpop.f32.mrb[0].mxu0
        %v1360 = vadd.f32 0.0, %v1359
        %v1361 = vpop.f32.mrb[0].mxu0
        %1362 = vmatprep.mubr.f32.mxu0 0.0
        %1363 = vmatmul.mubr.f32.gmra.mrb[0].mxu0 %v1273
        %v1364 = vpop.f32.mrb[0].mxu0
        %v1365 = vadd.f32 0.0, %v1364
        %v1366 = vpop.f32.mrb[0].mxu0
        %1367 = vmatprep.mubr.f32.mxu0 0.0
        %1368 = vmatmul.mubr.f32.gmra.mrb[0].mxu0 %v1276
        %v1369 = vpop.f32.mrb[0].mxu0
        %v1370 = vadd.f32 0.0, %v1369
        %v1371 = vpop.f32.mrb[0].mxu0
        %1372 = vmatprep.mubr.f32.mxu0 0.0
        %1373 = vmatmul.mubr.f32.gmra.mrb[0].mxu0 %v1279
        %v1374 = vpop.f32.mrb[0].mxu0
        %v1375 = vadd.f32 0.0, %v1374
        %v1376 = vpop.f32.mrb[0].mxu0
        %1377 = vmatprep.mubr.f32.mxu0 0.0
        %1378 = vmatmul.mubr.f32.gmra.mrb[0].mxu0 %v1282
        %v1379 = vpop.f32.mrb[0].mxu0
        %v1380 = vadd.f32 0.0, %v1379
        %v1381 = vpop.f32.mrb[0].mxu0
        %1382 = vmatprep.mubr.f32.mxu0 0.0
        %1383 = vmatmul.mubr.f32.gmra.mrb[0].mxu0 %v1285
        %v1384 = vpop.f32.mrb[0].mxu0
        %v1385 = vadd.f32 0.0, %v1384
        %v1386 = vpop.f32.mrb[0].mxu0
        %1387 = vmatprep.mubr.f32.mxu0 0.0
        %1388 = vmatmul.mubr.f32.gmra.mrb[0].mxu0 %v1288
        %v1389 = vpop.f32.mrb[0].mxu0
        %v1390 = vadd.f32 0.0, %v1389
        %v1391 = vpop.f32.mrb[0].mxu0
        %1392 = vmatprep.mubr.f32.mxu0 0.0
        %1393 = vmatmul.mubr.f32.gmra.mrb[0].mxu0 %v1291
        %v1394 = vpop.f32.mrb[0].mxu0
        %v1395 = vadd.f32 0.0, %v1394
        %v1396 = vpop.f32.mrb[0].mxu0
        %1397 = vdwg.mxu0
        %v1398 = vrcp.pop %v1259
        %v1399 = vrcp.pop %v1260
        %v1400 = vrcp.pop %v1261
        %v1401 = vrcp.pop %v1262
        %v1402 = vrcp.pop %v1263
        %v1403 = vrcp.pop %v1264
        %v1404 = vrcp.pop %v1265
        %v1405 = vrcp.pop %v1266
        %v1406 = vmul.f32 %v1360, %v1398
        %v1407 = vmul.f32 %v1365, %v1399
        %v1408 = vmul.f32 %v1370, %v1400
        %v1409 = vmul.f32 %v1375, %v1401
        %v1410 = vmul.f32 %v1380, %v1402
        %v1411 = vmul.f32 %v1385, %v1403
        %v1412 = vmul.f32 %v1390, %v1404
        %v1413 = vmul.f32 %v1395, %v1405
        %v1414 = vld [vmem:[%s6] sm:$0x7]
        %v1415 = vpack.c.bf16 %v1407, %v1406
        %v1416 = vpack.c.bf16 %v1409, %v1408
        %v1417 = vpack.c.bf16 %v1411, %v1410
        %v1418 = vpack.c.bf16 %v1413, %v1412
        %v1419 = vld [vmem:[%s5] sm:$0xf]
        %v1420 = vld [vmem:[%s5 + $0x4] sm:$0xf]
        %v1421 = vld [vmem:[%s401] sm:$0xff]
        %v1422 = vld [vmem:[%s401 + $0x8] sm:$0xff]
        %1423 = vxpose.xlu0.b32.start [1/16] %v1421, 128
        %1424 = vxpose.xlu0.b32.cont [2/16] %v1422, 128
        %1425 = vxpose.xlu0.b32.cont [3/16] 0.0, 128
        %1426 = vxpose.xlu0.b32.cont [4/16] 0.0, 128
        %1427 = vxpose.xlu0.b32.cont [5/16] 0.0, 128
        %1428 = vxpose.xlu0.b32.cont [6/16] 0.0, 128
        %1429 = vxpose.xlu0.b32.cont [7/16] 0.0, 128
        %1430 = vxpose.xlu0.b32.cont [8/16] 0.0, 128
        %1431 = vxpose.xlu0.b32.cont [9/16] 0.0, 128
        %1432 = vxpose.xlu0.b32.cont [10/16] 0.0, 128
        %1433 = vxpose.xlu0.b32.cont [11/16] 0.0, 128
        %1434 = vxpose.xlu0.b32.cont [12/16] 0.0, 128
        %1435 = vxpose.xlu0.b32.cont [13/16] 0.0, 128
        %1436 = vxpose.xlu0.b32.cont [14/16] 0.0, 128
        %1437 = vxpose.xlu0.b32.cont [15/16] 0.0, 128
        %1438 = vxpose.xlu0.b32.end [16/16] 0.0, 128
        %v1439 = vpop.trf.xlu0
        %v1440 = vpop.trf.xlu0
        %v1441 = vpop.trf.xlu0
        %v1442 = vpop.trf.xlu0
        %v1443 = vpop.trf.xlu0
        %v1444 = vpop.trf.xlu0
        %v1445 = vpop.trf.xlu0
        %v1446 = vpop.trf.xlu0
        %v1447 = vpop.trf.xlu0
        %v1448 = vpop.trf.xlu0
        %v1449 = vpop.trf.xlu0
        %v1450 = vpop.trf.xlu0
        %v1451 = vpop.trf.xlu0
        %v1452 = vpop.trf.xlu0
        %v1453 = vpop.trf.xlu0
        %v1454 = vpop.trf.xlu0
        %v1455 = vpack.c.bf16 %v1440, %v1439
        %v1456 = vpack.c.bf16 %v1442, %v1441
        %v1457 = vpack.c.bf16 %v1444, %v1443
        %v1458 = vpack.c.bf16 %v1446, %v1445
        %v1459 = vld [vmem:[%s4] sm:$0xf]
        %v1460 = vld [vmem:[%s4 + $0x4] sm:$0xf]
        %v1463 = vunpack.c.l.b16 %v1459
        %v1464 = vunpack.c.l.b16 %v1460
        %v1465 = vpack.c.b16 %v1464, %v1463
        %v1468 = vsel %vm602, %v1455, 0
        %v1471 = vsel %vm602, %v1456, 0
        %v1474 = vsel %vm602, %v1457, 0
        %v1477 = vsel %vm602, %v1458, 0
        %1479 = vmatprep.subr.bf16.mxu0 0
        %1480 = vmatpush1.bf16.msra.mxu0 %v1465
        %1481 = vmatprep.subr.bf16.mxu0 0
        %1482 = vmatpush1.bf16.msra.mxu0 0
        %1483 = vmatprep.subr.bf16.mxu0 0
        %1484 = vmatpush1.bf16.msra.mxu0 0
        %1485 = vmatprep.subr.bf16.mxu0 0
        %1486 = vmatpush1.bf16.msra.mxu0 0
        %1487 = vmatprep.subr.bf16.mxu0 0
        %1488 = vmatpush1.bf16.msra.mxu0 0
        %1489 = vmatprep.subr.bf16.mxu0 0
        %1490 = vmatpush1.bf16.msra.mxu0 0
        %1491 = vmatprep.subr.bf16.mxu0 0
        %1492 = vmatpush1.bf16.msra.mxu0 0
        %1493 = vmatprep.subr.bf16.mxu0 0
        %1494 = vmatpush1.bf16.msra.mxu0 0
        %1495 = vmatprep.subr.bf16.mxu0 0
        %1496 = vmatpush1.bf16.msra.mxu0 0
        %1497 = vmatprep.subr.bf16.mxu0 0
        %1498 = vmatpush1.bf16.msra.mxu0 0
        %1499 = vmatprep.subr.bf16.mxu0 0
        %1500 = vmatpush1.bf16.msra.mxu0 0
        %1501 = vmatprep.subr.bf16.mxu0 0
        %1502 = vmatpush1.bf16.msra.mxu0 0
        %1503 = vmatprep.subr.bf16.mxu0 0
        %1504 = vmatpush1.bf16.msra.mxu0 0
        %1505 = vmatprep.subr.bf16.mxu0 0
        %1506 = vmatpush1.bf16.msra.mxu0 0
        %1507 = vmatprep.subr.bf16.mxu0 0
        %1508 = vmatpush1.bf16.msra.mxu0 0
        %1509 = vmatprep.subr.bf16.mxu0 0
        %1510 = vmatpush1.bf16.msra.mxu0 0
        %1511 = vmatprep.mubr.bf16.mxu0 0
        %1512 = vmatmul.mubr.bf16.gmra.mrb[0].mxu0 %v1468
        %v1513 = vpop.f32.mrb[0].mxu0
        %v1514 = vadd.f32 0.0, %v1513
        %v1515 = vpop.f32.mrb[0].mxu0
        %v1516 = vpop.f32.mrb[0].mxu0
        %v1517 = vadd.f32 0.0, %v1516
        %v1518 = vpop.f32.mrb[0].mxu0
        %1519 = vmatprep.mubr.bf16.mxu0 0
        %1520 = vmatmul.mubr.bf16.gmra.mrb[0].mxu0 %v1471
        %v1521 = vpop.f32.mrb[0].mxu0
        %v1522 = vadd.f32 0.0, %v1521
        %v1523 = vpop.f32.mrb[0].mxu0
        %v1524 = vpop.f32.mrb[0].mxu0
        %v1525 = vadd.f32 0.0, %v1524
        %v1526 = vpop.f32.mrb[0].mxu0
        %1527 = vmatprep.mubr.bf16.mxu0 0
        %1528 = vmatmul.mubr.bf16.gmra.mrb[0].mxu0 %v1474
        %v1529 = vpop.f32.mrb[0].mxu0
        %v1530 = vadd.f32 0.0, %v1529
        %v1531 = vpop.f32.mrb[0].mxu0
        %v1532 = vpop.f32.mrb[0].mxu0
        %v1533 = vadd.f32 0.0, %v1532
        %v1534 = vpop.f32.mrb[0].mxu0
        %1535 = vmatprep.mubr.bf16.mxu0 0
        %1536 = vmatmul.mubr.bf16.gmra.mrb[0].mxu0 %v1477
        %v1537 = vpop.f32.mrb[0].mxu0
        %v1538 = vadd.f32 0.0, %v1537
        %v1539 = vpop.f32.mrb[0].mxu0
        %v1540 = vpop.f32.mrb[0].mxu0
        %v1541 = vadd.f32 0.0, %v1540
        %v1542 = vpop.f32.mrb[0].mxu0
        %1543 = vdwg.mxu0
        %v1546 = vunpack.c.l.b16 %v1419
        %v1547 = vunpack.c.l.b16 %v1420
        %v1548 = vpack.c.b16 %v1547, %v1546
        %v1551 = vsel %vm602, %v1415, 0
        %v1554 = vsel %vm602, %v1416, 0
        %v1557 = vsel %vm602, %v1417, 0
        %v1560 = vsel %vm602, %v1418, 0
        %1562 = vmatprep.subr.bf16.mxu0 0
        %1563 = vmatpush1.bf16.msra.mxu0 %v1548
        %1564 = vmatprep.subr.bf16.mxu0 0
        %1565 = vmatpush1.bf16.msra.mxu0 0
        %1566 = vmatprep.subr.bf16.mxu0 0
        %1567 = vmatpush1.bf16.msra.mxu0 0
        %1568 = vmatprep.subr.bf16.mxu0 0
        %1569 = vmatpush1.bf16.msra.mxu0 0
        %1570 = vmatprep.subr.bf16.mxu0 0
        %1571 = vmatpush1.bf16.msra.mxu0 0
        %1572 = vmatprep.subr.bf16.mxu0 0
        %1573 = vmatpush1.bf16.msra.mxu0 0
        %1574 = vmatprep.subr.bf16.mxu0 0
        %1575 = vmatpush1.bf16.msra.mxu0 0
        %1576 = vmatprep.subr.bf16.mxu0 0
        %1577 = vmatpush1.bf16.msra.mxu0 0
        %1578 = vmatprep.subr.bf16.mxu0 0
        %1579 = vmatpush1.bf16.msra.mxu0 0
        %1580 = vmatprep.subr.bf16.mxu0 0
        %1581 = vmatpush1.bf16.msra.mxu0 0
        %1582 = vmatprep.subr.bf16.mxu0 0
        %1583 = vmatpush1.bf16.msra.mxu0 0
        %1584 = vmatprep.subr.bf16.mxu0 0
        %1585 = vmatpush1.bf16.msra.mxu0 0
        %1586 = vmatprep.subr.bf16.mxu0 0
        %1587 = vmatpush1.bf16.msra.mxu0 0
        %1588 = vmatprep.subr.bf16.mxu0 0
        %1589 = vmatpush1.bf16.msra.mxu0 0
        %1590 = vmatprep.subr.bf16.mxu0 0
        %1591 = vmatpush1.bf16.msra.mxu0 0
        %1592 = vmatprep.subr.bf16.mxu0 0
        %1593 = vmatpush1.bf16.msra.mxu0 0
        %1594 = vmatprep.mubr.bf16.mxu0 0
        %1595 = vmatmul.mubr.bf16.gmra.mrb[0].mxu0 %v1551
        %v1596 = vpop.f32.mrb[0].mxu0
        %v1597 = vadd.f32 %v1514, %v1596
        %v1598 = vpop.f32.mrb[0].mxu0
        %v1599 = vpop.f32.mrb[0].mxu0
        %v1600 = vadd.f32 %v1517, %v1599
        %v1601 = vpop.f32.mrb[0].mxu0
        %1602 = vmatprep.mubr.bf16.mxu0 0
        %1603 = vmatmul.mubr.bf16.gmra.mrb[0].mxu0 %v1554
        %v1604 = vpop.f32.mrb[0].mxu0
        %v1605 = vadd.f32 %v1522, %v1604
        %v1606 = vpop.f32.mrb[0].mxu0
        %v1607 = vpop.f32.mrb[0].mxu0
        %v1608 = vadd.f32 %v1525, %v1607
        %v1609 = vpop.f32.mrb[0].mxu0
        %1610 = vmatprep.mubr.bf16.mxu0 0
        %1611 = vmatmul.mubr.bf16.gmra.mrb[0].mxu0 %v1557
        %v1612 = vpop.f32.mrb[0].mxu0
        %v1613 = vadd.f32 %v1530, %v1612
        %v1614 = vpop.f32.mrb[0].mxu0
        %v1615 = vpop.f32.mrb[0].mxu0
        %v1616 = vadd.f32 %v1533, %v1615
        %v1617 = vpop.f32.mrb[0].mxu0
        %1618 = vmatprep.mubr.bf16.mxu0 0
        %1619 = vmatmul.mubr.bf16.gmra.mrb[0].mxu0 %v1560
        %v1620 = vpop.f32.mrb[0].mxu0
        %v1621 = vadd.f32 %v1538, %v1620
        %v1622 = vpop.f32.mrb[0].mxu0
        %v1623 = vpop.f32.mrb[0].mxu0
        %v1624 = vadd.f32 %v1541, %v1623
        %v1625 = vpop.f32.mrb[0].mxu0
        %1626 = vdwg.mxu0
        %v1627 = vlaneseq
        %v1628 = vshrl.u32 %v1627, 7
        %v1629 = vsub.s32 0, %v1628
        %v1630 = vrot.slane %v1414, %v1629
        %v1631 = vadd.f32 %v1597, %v1630
        %v1632 = vadd.f32 %v1600, %v1630
        %v1633 = vadd.f32 %v1605, %v1630
        %v1634 = vadd.f32 %v1608, %v1630
        %v1635 = vadd.f32 %v1613, %v1630
        %v1636 = vadd.f32 %v1616, %v1630
        %v1637 = vadd.f32 %v1621, %v1630
        %v1638 = vadd.f32 %v1624, %v1630
        %v1639 = vmul.f32 %v1631, 0.5
        %v1640 = vmul.f32 %v1632, 0.5
        %v1641 = vmul.f32 %v1633, 0.5
        %v1642 = vmul.f32 %v1634, 0.5
        %v1643 = vmul.f32 %v1635, 0.5
        %v1644 = vmul.f32 %v1636, 0.5
        %v1645 = vmul.f32 %v1637, 0.5
        %v1646 = vmul.f32 %v1638, 0.5
        %v1647 = vmul.f32 %v1631, 0.044715
        %v1648 = vmul.f32 %v1632, 0.044715
        %v1649 = vmul.f32 %v1633, 0.044715
        %v1650 = vmul.f32 %v1634, 0.044715
        %v1651 = vmul.f32 %v1635, 0.044715
        %v1652 = vmul.f32 %v1636, 0.044715
        %v1653 = vmul.f32 %v1637, 0.044715
        %v1654 = vmul.f32 %v1638, 0.044715
        %v1655 = vmul.f32 %v1647, %v1631
        %v1656 = vmul.f32 %v1648, %v1632
        %v1657 = vmul.f32 %v1649, %v1633
        %v1658 = vmul.f32 %v1650, %v1634
        %v1659 = vmul.f32 %v1651, %v1635
        %v1660 = vmul.f32 %v1652, %v1636
        %v1661 = vmul.f32 %v1653, %v1637
        %v1662 = vmul.f32 %v1654, %v1638
        %v1663 = vmul.f32 %v1655, %v1631
        %v1664 = vmul.f32 %v1656, %v1632
        %v1665 = vmul.f32 %v1657, %v1633
        %v1666 = vmul.f32 %v1658, %v1634
        %v1667 = vmul.f32 %v1659, %v1635
        %v1668 = vmul.f32 %v1660, %v1636
        %v1669 = vmul.f32 %v1661, %v1637
        %v1670 = vmul.f32 %v1662, %v1638
        %v1671 = vadd.f32 %v1631, %v1663
        %v1672 = vadd.f32 %v1632, %v1664
        %v1673 = vadd.f32 %v1633, %v1665
        %v1674 = vadd.f32 %v1634, %v1666
        %v1675 = vadd.f32 %v1635, %v1667
        %v1676 = vadd.f32 %v1636, %v1668
        %v1677 = vadd.f32 %v1637, %v1669
        %v1678 = vadd.f32 %v1638, %v1670
        %v1679 = vmul.f32 %v1671, 0.7978846
        %v1680 = vmul.f32 %v1672, 0.7978846
        %v1681 = vmul.f32 %v1673, 0.7978846
        %v1682 = vmul.f32 %v1674, 0.7978846
        %v1683 = vmul.f32 %v1675, 0.7978846
        %v1684 = vmul.f32 %v1676, 0.7978846
        %v1685 = vmul.f32 %v1677, 0.7978846
        %v1686 = vmul.f32 %v1678, 0.7978846
        %v1687 = vtanh.pop %v1679
        %v1688 = vtanh.pop %v1680
        %v1689 = vtanh.pop %v1681
        %v1690 = vtanh.pop %v1682
        %v1691 = vtanh.pop %v1683
        %v1692 = vtanh.pop %v1684
        %v1693 = vtanh.pop %v1685
        %v1694 = vtanh.pop %v1686
        %v1695 = vadd.f32 %v1687, 1.0
        %v1696 = vadd.f32 %v1688, 1.0
        %v1697 = vadd.f32 %v1689, 1.0
        %v1698 = vadd.f32 %v1690, 1.0
        %v1699 = vadd.f32 %v1691, 1.0
        %v1700 = vadd.f32 %v1692, 1.0
        %v1701 = vadd.f32 %v1693, 1.0
        %v1702 = vadd.f32 %v1694, 1.0
        %v1703 = vmul.f32 %v1639, %v1695
        %v1704 = vmul.f32 %v1640, %v1696
        %v1705 = vmul.f32 %v1641, %v1697
        %v1706 = vmul.f32 %v1642, %v1698
        %v1707 = vmul.f32 %v1643, %v1699
        %v1708 = vmul.f32 %v1644, %v1700
        %v1709 = vmul.f32 %v1645, %v1701
        %v1710 = vmul.f32 %v1646, %v1702
        %v1711 = vld [vmem:[%s7] sm:$0xf]
        %v1712 = vld [vmem:[%s7 + $0x4] sm:$0xf]
        %v1713 = vld [vmem:[%s7 + $0x8] sm:$0xf]
        %v1714 = vld [vmem:[%s7 + $0xc] sm:$0xf]
        %s1715 = scalar_lea.vmem %s7, 16
        %v1716 = vld [vmem:[%s1715] sm:$0xf]
        %v1717 = vld [vmem:[%s1715 + $0x4] sm:$0xf]
        %v1718 = vld [vmem:[%s1715 + $0x8] sm:$0xf]
        %v1719 = vld [vmem:[%s1715 + $0xc] sm:$0xf]
        %v1720 = vpack.c.bf16 %v1704, %v1703
        %v1721 = vpack.c.bf16 %v1706, %v1705
        %v1722 = vpack.c.bf16 %v1708, %v1707
        %v1723 = vpack.c.bf16 %v1710, %v1709
        %v1724 = vlaneseq
        %v1725 = vshrl.u32 %v1724, 7
        %v1726 = vsub.s32 1, %v1725
        %v1727 = vrot.slane %v1414, %v1726
        %v1732 = vunpack.c.l.b16 %v1711
        %v1733 = vunpack.c.l.b16 %v1712
        %v1734 = vunpack.c.l.b16 %v1713
        %v1735 = vunpack.c.l.b16 %v1714
        %v1736 = vpack.c.b16 %v1733, %v1732
        %v1737 = vpack.c.b16 %v1735, %v1734
        %vm1740 = vcmask 261120
        %v1742 = vsel %vm1740, %v1720, 0
        %v1745 = vsel %vm1740, %v1721, 0
        %v1748 = vsel %vm1740, %v1722, 0
        %v1751 = vsel %vm1740, %v1723, 0
        %1753 = vmatprep.subr.bf16.mxu0 0
        %1754 = vmatpush1.bf16.msra.mxu0 %v1736
        %1755 = vmatprep.subr.bf16.mxu0 0
        %1756 = vmatpush1.bf16.msra.mxu0 %v1737
        %1757 = vmatprep.subr.bf16.mxu0 0
        %1758 = vmatpush1.bf16.msra.mxu0 0
        %1759 = vmatprep.subr.bf16.mxu0 0
        %1760 = vmatpush1.bf16.msra.mxu0 0
        %1761 = vmatprep.subr.bf16.mxu0 0
        %1762 = vmatpush1.bf16.msra.mxu0 0
        %1763 = vmatprep.subr.bf16.mxu0 0
        %1764 = vmatpush1.bf16.msra.mxu0 0
        %1765 = vmatprep.subr.bf16.mxu0 0
        %1766 = vmatpush1.bf16.msra.mxu0 0
        %1767 = vmatprep.subr.bf16.mxu0 0
        %1768 = vmatpush1.bf16.msra.mxu0 0
        %1769 = vmatprep.subr.bf16.mxu0 0
        %1770 = vmatpush1.bf16.msra.mxu0 0
        %1771 = vmatprep.subr.bf16.mxu0 0
        %1772 = vmatpush1.bf16.msra.mxu0 0
        %1773 = vmatprep.subr.bf16.mxu0 0
        %1774 = vmatpush1.bf16.msra.mxu0 0
        %1775 = vmatprep.subr.bf16.mxu0 0
        %1776 = vmatpush1.bf16.msra.mxu0 0
        %1777 = vmatprep.subr.bf16.mxu0 0
        %1778 = vmatpush1.bf16.msra.mxu0 0
        %1779 = vmatprep.subr.bf16.mxu0 0
        %1780 = vmatpush1.bf16.msra.mxu0 0
        %1781 = vmatprep.subr.bf16.mxu0 0
        %1782 = vmatpush1.bf16.msra.mxu0 0
        %1783 = vmatprep.subr.bf16.mxu0 0
        %1784 = vmatpush1.bf16.msra.mxu0 0
        %1785 = vmatprep.mubr.bf16.mxu0 0
        %1786 = vmatmul.mubr.bf16.gmra.mrb[0].mxu0 %v1742
        %v1787 = vpop.f32.mrb[0].mxu0
        %v1788 = vadd.f32 %v1727, %v1787
        %v1789 = vpop.f32.mrb[0].mxu0
        %v1790 = vpop.f32.mrb[0].mxu0
        %v1791 = vadd.f32 %v1727, %v1790
        %v1792 = vpop.f32.mrb[0].mxu0
        %1793 = vmatprep.mubr.bf16.mxu0 0
        %1794 = vmatmul.mubr.bf16.gmra.mrb[0].mxu0 %v1745
        %v1795 = vpop.f32.mrb[0].mxu0
        %v1796 = vadd.f32 %v1727, %v1795
        %v1797 = vpop.f32.mrb[0].mxu0
        %v1798 = vpop.f32.mrb[0].mxu0
        %v1799 = vadd.f32 %v1727, %v1798
        %v1800 = vpop.f32.mrb[0].mxu0
        %1801 = vmatprep.mubr.bf16.mxu0 0
        %1802 = vmatmul.mubr.bf16.gmra.mrb[0].mxu0 %v1748
        %v1803 = vpop.f32.mrb[0].mxu0
        %v1804 = vadd.f32 %v1727, %v1803
        %v1805 = vpop.f32.mrb[0].mxu0
        %v1806 = vpop.f32.mrb[0].mxu0
        %v1807 = vadd.f32 %v1727, %v1806
        %v1808 = vpop.f32.mrb[0].mxu0
        %1809 = vmatprep.mubr.bf16.mxu0 0
        %1810 = vmatmul.mubr.bf16.gmra.mrb[0].mxu0 %v1751
        %v1811 = vpop.f32.mrb[0].mxu0
        %v1812 = vadd.f32 %v1727, %v1811
        %v1813 = vpop.f32.mrb[0].mxu0
        %v1814 = vpop.f32.mrb[0].mxu0
        %v1815 = vadd.f32 %v1727, %v1814
        %v1816 = vpop.f32.mrb[0].mxu0
        %1817 = vdwg.mxu0
        %v1818 = vmul.f32 %v1788, 0.5
        %v1819 = vmul.f32 %v1791, 0.5
        %v1820 = vmul.f32 %v1796, 0.5
        %v1821 = vmul.f32 %v1799, 0.5
        %v1822 = vmul.f32 %v1804, 0.5
        %v1823 = vmul.f32 %v1807, 0.5
        %v1824 = vmul.f32 %v1812, 0.5
        %v1825 = vmul.f32 %v1815, 0.5
        %v1826 = vmul.f32 %v1788, 0.044715
        %v1827 = vmul.f32 %v1791, 0.044715
        %v1828 = vmul.f32 %v1796, 0.044715
        %v1829 = vmul.f32 %v1799, 0.044715
        %v1830 = vmul.f32 %v1804, 0.044715
        %v1831 = vmul.f32 %v1807, 0.044715
        %v1832 = vmul.f32 %v1812, 0.044715
        %v1833 = vmul.f32 %v1815, 0.044715
        %v1834 = vmul.f32 %v1826, %v1788
        %v1835 = vmul.f32 %v1827, %v1791
        %v1836 = vmul.f32 %v1828, %v1796
        %v1837 = vmul.f32 %v1829, %v1799
        %v1838 = vmul.f32 %v1830, %v1804
        %v1839 = vmul.f32 %v1831, %v1807
        %v1840 = vmul.f32 %v1832, %v1812
        %v1841 = vmul.f32 %v1833, %v1815
        %v1842 = vmul.f32 %v1834, %v1788
        %v1843 = vmul.f32 %v1835, %v1791
        %v1844 = vmul.f32 %v1836, %v1796
        %v1845 = vmul.f32 %v1837, %v1799
        %v1846 = vmul.f32 %v1838, %v1804
        %v1847 = vmul.f32 %v1839, %v1807
        %v1848 = vmul.f32 %v1840, %v1812
        %v1849 = vmul.f32 %v1841, %v1815
        %v1850 = vadd.f32 %v1788, %v1842
        %v1851 = vadd.f32 %v1791, %v1843
        %v1852 = vadd.f32 %v1796, %v1844
        %v1853 = vadd.f32 %v1799, %v1845
        %v1854 = vadd.f32 %v1804, %v1846
        %v1855 = vadd.f32 %v1807, %v1847
        %v1856 = vadd.f32 %v1812, %v1848
        %v1857 = vadd.f32 %v1815, %v1849
        %v1858 = vmul.f32 %v1850, 0.7978846
        %v1859 = vmul.f32 %v1851, 0.7978846
        %v1860 = vmul.f32 %v1852, 0.7978846
        %v1861 = vmul.f32 %v1853, 0.7978846
        %v1862 = vmul.f32 %v1854, 0.7978846
        %v1863 = vmul.f32 %v1855, 0.7978846
        %v1864 = vmul.f32 %v1856, 0.7978846
        %v1865 = vmul.f32 %v1857, 0.7978846
        %v1866 = vtanh.pop %v1858
        %v1867 = vtanh.pop %v1859
        %v1868 = vtanh.pop %v1860
        %v1869 = vtanh.pop %v1861
        %v1870 = vtanh.pop %v1862
        %v1871 = vtanh.pop %v1863
        %v1872 = vtanh.pop %v1864
        %v1873 = vtanh.pop %v1865
        %v1874 = vadd.f32 %v1866, 1.0
        %v1875 = vadd.f32 %v1867, 1.0
        %v1876 = vadd.f32 %v1868, 1.0
        %v1877 = vadd.f32 %v1869, 1.0
        %v1878 = vadd.f32 %v1870, 1.0
        %v1879 = vadd.f32 %v1871, 1.0
        %v1880 = vadd.f32 %v1872, 1.0
        %v1881 = vadd.f32 %v1873, 1.0
        %v1882 = vmul.f32 %v1818, %v1874
        %v1883 = vmul.f32 %v1819, %v1875
        %v1884 = vmul.f32 %v1820, %v1876
        %v1885 = vmul.f32 %v1821, %v1877
        %v1886 = vmul.f32 %v1822, %v1878
        %v1887 = vmul.f32 %v1823, %v1879
        %v1888 = vmul.f32 %v1824, %v1880
        %v1889 = vmul.f32 %v1825, %v1881
        %v1890 = vpack.c.bf16 %v1883, %v1882
        %v1891 = vpack.c.bf16 %v1885, %v1884
        %v1892 = vpack.c.bf16 %v1887, %v1886
        %v1893 = vpack.c.bf16 %v1889, %v1888
        %v1894 = vlaneseq
        %v1895 = vshrl.u32 %v1894, 7
        %v1896 = vsub.s32 2, %v1895
        %v1897 = vrot.slane %v1414, %v1896
        %v1902 = vunpack.c.l.b16 %v1716
        %v1903 = vunpack.c.l.b16 %v1717
        %v1904 = vunpack.c.l.b16 %v1718
        %v1905 = vunpack.c.l.b16 %v1719
        %v1906 = vpack.c.b16 %v1903, %v1902
        %v1907 = vpack.c.b16 %v1905, %v1904
        %v1911 = vsel %vm1740, %v1890, 0
        %v1914 = vsel %vm1740, %v1891, 0
        %v1917 = vsel %vm1740, %v1892, 0
        %v1920 = vsel %vm1740, %v1893, 0
        %1922 = vmatprep.subr.bf16.mxu0 0
        %1923 = vmatpush1.bf16.msra.mxu0 %v1906
        %1924 = vmatprep.subr.bf16.mxu0 0
        %1925 = vmatpush1.bf16.msra.mxu0 %v1907
        %1926 = vmatprep.subr.bf16.mxu0 0
        %1927 = vmatpush1.bf16.msra.mxu0 0
        %1928 = vmatprep.subr.bf16.mxu0 0
        %1929 = vmatpush1.bf16.msra.mxu0 0
        %1930 = vmatprep.subr.bf16.mxu0 0
        %1931 = vmatpush1.bf16.msra.mxu0 0
        %1932 = vmatprep.subr.bf16.mxu0 0
        %1933 = vmatpush1.bf16.msra.mxu0 0
        %1934 = vmatprep.subr.bf16.mxu0 0
        %1935 = vmatpush1.bf16.msra.mxu0 0
        %1936 = vmatprep.subr.bf16.mxu0 0
        %1937 = vmatpush1.bf16.msra.mxu0 0
        %1938 = vmatprep.subr.bf16.mxu0 0
        %1939 = vmatpush1.bf16.msra.mxu0 0
        %1940 = vmatprep.subr.bf16.mxu0 0
        %1941 = vmatpush1.bf16.msra.mxu0 0
        %1942 = vmatprep.subr.bf16.mxu0 0
        %1943 = vmatpush1.bf16.msra.mxu0 0
        %1944 = vmatprep.subr.bf16.mxu0 0
        %1945 = vmatpush1.bf16.msra.mxu0 0
        %1946 = vmatprep.subr.bf16.mxu0 0
        %1947 = vmatpush1.bf16.msra.mxu0 0
        %1948 = vmatprep.subr.bf16.mxu0 0
        %1949 = vmatpush1.bf16.msra.mxu0 0
        %1950 = vmatprep.subr.bf16.mxu0 0
        %1951 = vmatpush1.bf16.msra.mxu0 0
        %1952 = vmatprep.subr.bf16.mxu0 0
        %1953 = vmatpush1.bf16.msra.mxu0 0
        %1954 = vmatprep.mubr.bf16.mxu0 0
        %1955 = vmatmul.mubr.bf16.gmra.mrb[0].mxu0 %v1911
        %v1956 = vpop.f32.mrb[0].mxu0
        %v1957 = vadd.f32 %v1897, %v1956
        %v1958 = vpop.f32.mrb[0].mxu0
        %v1959 = vpop.f32.mrb[0].mxu0
        %v1960 = vadd.f32 %v1897, %v1959
        %v1961 = vpop.f32.mrb[0].mxu0
        %1962 = vmatprep.mubr.bf16.mxu0 0
        %1963 = vmatmul.mubr.bf16.gmra.mrb[0].mxu0 %v1914
        %v1964 = vpop.f32.mrb[0].mxu0
        %v1965 = vadd.f32 %v1897, %v1964
        %v1966 = vpop.f32.mrb[0].mxu0
        %v1967 = vpop.f32.mrb[0].mxu0
        %v1968 = vadd.f32 %v1897, %v1967
        %v1969 = vpop.f32.mrb[0].mxu0
        %1970 = vmatprep.mubr.bf16.mxu0 0
        %1971 = vmatmul.mubr.bf16.gmra.mrb[0].mxu0 %v1917
        %v1972 = vpop.f32.mrb[0].mxu0
        %v1973 = vadd.f32 %v1897, %v1972
        %v1974 = vpop.f32.mrb[0].mxu0
        %v1975 = vpop.f32.mrb[0].mxu0
        %v1976 = vadd.f32 %v1897, %v1975
        %v1977 = vpop.f32.mrb[0].mxu0
        %1978 = vmatprep.mubr.bf16.mxu0 0
        %1979 = vmatmul.mubr.bf16.gmra.mrb[0].mxu0 %v1920
        %v1980 = vpop.f32.mrb[0].mxu0
        %v1981 = vadd.f32 %v1897, %v1980
        %v1982 = vpop.f32.mrb[0].mxu0
        %v1983 = vpop.f32.mrb[0].mxu0
        %v1984 = vadd.f32 %v1897, %v1983
        %v1985 = vpop.f32.mrb[0].mxu0
        %1986 = vdwg.mxu0
        %v1987 = vadd.f32 %v1957, %v1703
        %v1988 = vadd.f32 %v1960, %v1704
        %v1989 = vadd.f32 %v1965, %v1705
        %v1990 = vadd.f32 %v1968, %v1706
        %v1991 = vadd.f32 %v1973, %v1707
        %v1992 = vadd.f32 %v1976, %v1708
        %v1993 = vadd.f32 %v1981, %v1709
        %v1994 = vadd.f32 %v1984, %v1710
        %v1995 = vmul.f32 %v1987, 0.5
        %v1996 = vmul.f32 %v1988, 0.5
        %v1997 = vmul.f32 %v1989, 0.5
        %v1998 = vmul.f32 %v1990, 0.5
        %v1999 = vmul.f32 %v1991, 0.5
        %v2000 = vmul.f32 %v1992, 0.5
        %v2001 = vmul.f32 %v1993, 0.5
        %v2002 = vmul.f32 %v1994, 0.5
        %v2003 = vmul.f32 %v1987, 0.044715
        %v2004 = vmul.f32 %v1988, 0.044715
        %v2005 = vmul.f32 %v1989, 0.044715
        %v2006 = vmul.f32 %v1990, 0.044715
        %v2007 = vmul.f32 %v1991, 0.044715
        %v2008 = vmul.f32 %v1992, 0.044715
        %v2009 = vmul.f32 %v1993, 0.044715
        %v2010 = vmul.f32 %v1994, 0.044715
        %v2011 = vmul.f32 %v2003, %v1987
        %v2012 = vmul.f32 %v2004, %v1988
        %v2013 = vmul.f32 %v2005, %v1989
        %v2014 = vmul.f32 %v2006, %v1990
        %v2015 = vmul.f32 %v2007, %v1991
        %v2016 = vmul.f32 %v2008, %v1992
        %v2017 = vmul.f32 %v2009, %v1993
        %v2018 = vmul.f32 %v2010, %v1994
        %v2019 = vmul.f32 %v2011, %v1987
        %v2020 = vmul.f32 %v2012, %v1988
        %v2021 = vmul.f32 %v2013, %v1989
        %v2022 = vmul.f32 %v2014, %v1990
        %v2023 = vmul.f32 %v2015, %v1991
        %v2024 = vmul.f32 %v2016, %v1992
        %v2025 = vmul.f32 %v2017, %v1993
        %v2026 = vmul.f32 %v2018, %v1994
        %v2027 = vadd.f32 %v1987, %v2019
        %v2028 = vadd.f32 %v1988, %v2020
        %v2029 = vadd.f32 %v1989, %v2021
        %v2030 = vadd.f32 %v1990, %v2022
        %v2031 = vadd.f32 %v1991, %v2023
        %v2032 = vadd.f32 %v1992, %v2024
        %v2033 = vadd.f32 %v1993, %v2025
        %v2034 = vadd.f32 %v1994, %v2026
        %v2035 = vmul.f32 %v2027, 0.7978846
        %v2036 = vmul.f32 %v2028, 0.7978846
        %v2037 = vmul.f32 %v2029, 0.7978846
        %v2038 = vmul.f32 %v2030, 0.7978846
        %v2039 = vmul.f32 %v2031, 0.7978846
        %v2040 = vmul.f32 %v2032, 0.7978846
        %v2041 = vmul.f32 %v2033, 0.7978846
        %v2042 = vmul.f32 %v2034, 0.7978846
        %v2043 = vtanh.pop %v2035
        %v2044 = vtanh.pop %v2036
        %v2045 = vtanh.pop %v2037
        %v2046 = vtanh.pop %v2038
        %v2047 = vtanh.pop %v2039
        %v2048 = vtanh.pop %v2040
        %v2049 = vtanh.pop %v2041
        %v2050 = vtanh.pop %v2042
        %v2051 = vadd.f32 %v2043, 1.0
        %v2052 = vadd.f32 %v2044, 1.0
        %v2053 = vadd.f32 %v2045, 1.0
        %v2054 = vadd.f32 %v2046, 1.0
        %v2055 = vadd.f32 %v2047, 1.0
        %v2056 = vadd.f32 %v2048, 1.0
        %v2057 = vadd.f32 %v2049, 1.0
        %v2058 = vadd.f32 %v2050, 1.0
        %v2059 = vmul.f32 %v1995, %v2051
        %v2060 = vmul.f32 %v1996, %v2052
        %v2061 = vmul.f32 %v1997, %v2053
        %v2062 = vmul.f32 %v1998, %v2054
        %v2063 = vmul.f32 %v1999, %v2055
        %v2064 = vmul.f32 %v2000, %v2056
        %v2065 = vmul.f32 %v2001, %v2057
        %v2066 = vmul.f32 %v2002, %v2058
        %2067 = vxpose.xlu0.b32.start [1/16] %v2059, 128
        %2068 = vxpose.xlu0.b32.cont [2/16] %v2060, 128
        %2069 = vxpose.xlu0.b32.cont [3/16] %v2061, 128
        %2070 = vxpose.xlu0.b32.cont [4/16] %v2062, 128
        %2071 = vxpose.xlu0.b32.cont [5/16] %v2063, 128
        %2072 = vxpose.xlu0.b32.cont [6/16] %v2064, 128
        %2073 = vxpose.xlu0.b32.cont [7/16] %v2065, 128
        %2074 = vxpose.xlu0.b32.cont [8/16] %v2066, 128
        %2075 = vxpose.xlu0.b32.cont [9/16] 0.0, 128
        %2076 = vxpose.xlu0.b32.cont [10/16] 0.0, 128
        %2077 = vxpose.xlu0.b32.cont [11/16] 0.0, 128
        %2078 = vxpose.xlu0.b32.cont [12/16] 0.0, 128
        %2079 = vxpose.xlu0.b32.cont [13/16] 0.0, 128
        %2080 = vxpose.xlu0.b32.cont [14/16] 0.0, 128
        %2081 = vxpose.xlu0.b32.cont [15/16] 0.0, 128
        %2082 = vxpose.xlu0.b32.end [16/16] 0.0, 128
        %v2083 = vpop.trf.xlu0
        %v2084 = vpop.trf.xlu0
        %v2085 = vpop.trf.xlu0
        %v2086 = vpop.trf.xlu0
        %v2087 = vpop.trf.xlu0
        %v2088 = vpop.trf.xlu0
        %v2089 = vpop.trf.xlu0
        %v2090 = vpop.trf.xlu0
        %v2091 = vpop.trf.xlu0
        %v2092 = vpop.trf.xlu0
        %v2093 = vpop.trf.xlu0
        %v2094 = vpop.trf.xlu0
        %v2095 = vpop.trf.xlu0
        %v2096 = vpop.trf.xlu0
        %v2097 = vpop.trf.xlu0
        %v2098 = vpop.trf.xlu0
        %vm2099 = vcmask 523264
        %2100 = vst.msk [vmem:[%s374] sm:$0xff] %vm2099, %v2083
        %2101 = vst.msk [vmem:[%s374 + $0x8] sm:$0xff] %vm2099, %v2084
        %2102 = vst.msk [vmem:[%s374 + $0x10] sm:$0xff] %vm2099, %v2085
        %2103 = vst.msk [vmem:[%s374 + $0x18] sm:$0xff] %vm2099, %v2086
        %s2104 = sand.u32 %s236, 1
        %s2105 = scalar_lea.sflag [#allocation3], %s2104
        %s2106 = sand.u32 %s236, 1
        %s2107 = smul.addr %s2106, 32
        %s2108 = scalar_lea.vmem [#allocation2], %s2107
        // Predicated region
        $region53: #{feature_propagation_forward.1} parent=51 // pred_check
          %p2109 = pneg %p246
        $region54: #{feature_propagation_forward.1} parent=51 // pred_check_branch
          %2111 = sbr.rel (%p2109) target = $region56
        $region55: #{feature_propagation_forward.1} parent=51 // pred_region
          %s2113 = ssub.s32 512, 512
          %2114 = vsyncadd %s2105, %s2113
          %s2115 = smul.addr %s26, 4
          %s2116 = sadd.s32 %s27, %s2115
          %s2117 = smul.addr %s2116, 128
          %s2118 = scalar_lea.hbm %s8, %s2117
          %s2119 = sshll.u32 %s2108, 4
          %s2120 = int_to_ptr.vmem [resolvable:$true] %s2119
          %2125 = dma.vmem_to_hbm [thread:$0]  %s2120, 512, %s2118, %s2105, 128, 128, 8
        $region56: #{feature_propagation_forward.1} parent=51 // pred_fallthru
          _
      $region52: #{feature_propagation_forward.1} parent=5 // pred_fallthru
        _
      %p2126 = scmp.le.s32.totalorder 2, %s17
      // Predicated region
      $region57: #{feature_propagation_forward.1} parent=5 // pred_check
        %p2127 = pneg %p2126
      $region58: #{feature_propagation_forward.1} parent=5 // pred_check_branch
        %2129 = sbr.rel (%p2127) target = $region60
      $region59: #{feature_propagation_forward.1} parent=5 // pred_region
        %s2130 = ssub.s32 %s17, 2
        // Predicated region
        $region61: #{feature_propagation_forward.1} parent=59 // pred_check
          %p2131 = pneg %p252
        $region62: #{feature_propagation_forward.1} parent=59 // pred_check_branch
          %2133 = sbr.rel (%p2131) target = $region64
        $region63: #{feature_propagation_forward.1} parent=59 // pred_region
          %s2134 = sand.u32 %s237, 1
          %s2135 = scalar_lea.sflag [#allocation3], %s2134
          %s2136 = sand.u32 %s237, 1
          %s2137 = smul.addr %s2136, 32
          %s2138 = scalar_lea.vmem [#allocation2], %s2137
          %2139 = dma.done %s2135, 512
        $region64: #{feature_propagation_forward.1} parent=59 // pred_fallthru
          _
      $region60: #{feature_propagation_forward.1} parent=5 // pred_fallthru
        _
    $region6: #{feature_propagation_forward.1} parent=1 // loop_footer
      %s21 = sadd.s32 1, %s17
    $region7: #{feature_propagation_forward.1} parent=1 // loop_footer_branch
      %16 = sbr.rel target = $region3
    $region8: #{feature_propagation_forward.1} parent=1 // loop_exit
      _
    %2140 = vsyncpa [#allocation3], 1
    %s2141 = scalar_lea.sflag [#allocation3], 1
    %2142 = vsyncpa %s2141, 1

</llo_original>
